<compile_context>
chip_gen: v7x
topology: tpu7x:2x2x1
jax: 0.10.0
libtpu: 0.0.40
codegen_flags: <defaults>
</compile_context>

<pallas_src>
import jax
import jax.numpy as jnp
from jax.experimental import pallas as pl
from jax.experimental.pallas import tpu as pltpu

MNIST_DIM = 28 * 28   # 784
D_PAD = 896           # 7 * 128 (zero-padded feature dim)
H1 = 128
H2 = 32
H2_PAD = 128          # zero-padded hidden-2 dim
OUT = 1


def discriminator_kernel(x_ref, w1_ref, b1_ref, w2_ref, b2_ref, w3_ref, b3_ref, o_ref):
    # Layer 1: (tb, 896) bf16 @ (896, 128) bf16 -> f32 accumulate, bias + ReLU in f32.
    h = jnp.dot(x_ref[...], w1_ref[...], preferred_element_type=jnp.float32)
    h = jnp.maximum(h + b1_ref[...], 0.0)

    # Layer 2: (tb, 128) bf16 @ (128, 128) bf16 -> f32 accumulate, bias + ReLU in f32.
    h = jnp.dot(h.astype(jnp.bfloat16), w2_ref[...], preferred_element_type=jnp.float32)
    h = jnp.maximum(h + b2_ref[...], 0.0)

    # Layer 3: contract the padded hidden dim of w3 (1, 128) against h (tb, 128)
    # -> (1, tb): the result is already lane-dense, so the store is a full vst.
    o = jax.lax.dot_general(
        w3_ref[...], h,
        dimension_numbers=(((1,), (1,)), ((), ())),
        preferred_element_type=jnp.float32,
    )
    o_ref[...] = (o + b3_ref[0]).astype(o_ref.dtype)


def _round_up(x, m):
    return ((x + m - 1) // m) * m


def _choose_tb(b_pad, max_tb):
    """Largest 128-multiple tile dividing b_pad, preferring >= 2 grid steps (v7x)."""
    cands = [t for t in range(128, min(max_tb, b_pad) + 1, 128) if b_pad % t == 0]
    tb = max(cands)
    multi = [t for t in cands if b_pad // t >= 2]
    if multi:
        tb = max(multi)
    return tb


def prepare_params(params):
    """Zero-pad + cast (in, out)-layout params for the kernel (numerically exact)."""
    w1, b1, w2, b2, w3, b3 = params
    w1p = jnp.zeros((D_PAD, H1), jnp.bfloat16).at[:MNIST_DIM, :].set(w1.astype(jnp.bfloat16))
    b1p = b1.reshape(1, H1).astype(jnp.float32)
    w2p = jnp.zeros((H1, H2_PAD), jnp.bfloat16).at[:, :H2].set(w2.astype(jnp.bfloat16))
    b2p = jnp.zeros((1, H2_PAD), jnp.float32).at[:, :H2].set(b2.reshape(1, H2).astype(jnp.float32))
    w3p = jnp.zeros((1, H2_PAD), jnp.float32).at[:, :H2].set(w3.reshape(1, H2).astype(jnp.float32))
    b3p = b3.reshape(1).astype(jnp.float32)
    return (w1p, b1p, w2p, b2p, w3p, b3p)


def discriminator_forward(x, params, *, max_tb=512):
    """x: (B, MNIST_DIM) float32. Returns (B, 1) float32."""
    w1p, b1p, w2p, b2p, w3p, b3p = prepare_params(params)

    B = x.shape[0]
    b_pad = _round_up(B, 128)
    tb = _choose_tb(b_pad, max_tb)

    # Zero-pad batch and feature dims; cast input to bf16 (f32 accumulation in-kernel).
    xp = jnp.zeros((b_pad, D_PAD), jnp.bfloat16)
    xp = xp.at[:B, :MNIST_DIM].set(x.astype(jnp.bfloat16))

    grid = (b_pad // tb,)
    out = pl.pallas_call(
        discriminator_kernel,
        out_shape=jax.ShapeDtypeStruct((1, b_pad), jnp.float32),
        grid=grid,
        in_specs=[
            pl.BlockSpec((tb, D_PAD), lambda i: (i, 0)),      # x tile (bf16)
            pl.BlockSpec((D_PAD, H1), lambda i: (0, 0)),      # w1 (bf16, resident)
            pl.BlockSpec((1, H1), lambda i: (0, 0)),          # b1 (f32)
            pl.BlockSpec((H1, H2_PAD), lambda i: (0, 0)),     # w2 (bf16, resident)
            pl.BlockSpec((1, H2_PAD), lambda i: (0, 0)),      # b2 (f32)
            pl.BlockSpec((1, H2_PAD), lambda i: (0, 0)),      # w3 row (f32)
            pl.BlockSpec(memory_space=pltpu.MemorySpace.SMEM),  # b3 scalar
        ],
        out_specs=pl.BlockSpec((1, tb), lambda i: (0, i)),    # lane-dense output row
        compiler_params=pltpu.CompilerParams(
            dimension_semantics=("parallel",),
        ),
    )(xp, w1p, b1p, w2p, b2p, w3p, b3p)

    return out[0, :B].reshape(B, OUT)


def init_params(key):
    """Matches nn.init.uniform_(-0.05, 0.05) weights, zero biases; (in, out) layout."""
    k1, k2, k3 = jax.random.split(key, 3)
    w1 = jax.random.uniform(k1, (MNIST_DIM, H1), jnp.float32, minval=-0.05, maxval=0.05)
    b1 = jnp.zeros((1, H1), jnp.float32)
    w2 = jax.random.uniform(k2, (H1, H2), jnp.float32, minval=-0.05, maxval=0.05)
    b2 = jnp.zeros((1, H2), jnp.float32)
    w3 = jax.random.uniform(k3, (H2, OUT), jnp.float32, minval=-0.05, maxval=0.05)
    b3 = jnp.zeros((1, OUT), jnp.float32)
    return (w1, b1, w2, b2, w3, b3)


def reference_forward(x, params):
    w1, b1, w2, b2, w3, b3 = params
    h = jnp.maximum(x @ w1 + b1.reshape(1, -1), 0.0)
    h = jnp.maximum(h @ w2 + b2.reshape(1, -1), 0.0)
    return h @ w3 + b3.reshape(1, -1)


if __name__ == "__main__":
    key = jax.random.PRNGKey(0)
    pkey, xkey = jax.random.split(key)

    params = init_params(pkey)
    B = 200  # deliberately not a multiple of 128 to exercise the padding path
    x = jax.random.normal(xkey, (B, MNIST_DIM), jnp.float32)

    out = jax.block_until_ready(discriminator_forward(x, params))
    ref = reference_forward(x, params)

    assert out.shape == (B, OUT), out.shape
    max_err = float(jnp.max(jnp.abs(out - ref)))
    assert jnp.allclose(out, ref, atol=2e-2, rtol=2e-2), f"mismatch vs reference, max_err={max_err}"

    print("KERNEL_OK")
</pallas_src>

<mosaic_0001>
module attributes {stable_mosaic.version = 11 : i64} {
  func.func @discriminator_kernel(%arg0: i32, %arg1: memref<128x896xbf16, #tpu.memory_space<vmem>>, %arg2: memref<896x128xbf16, #tpu.memory_space<vmem>>, %arg3: memref<1x128xf32, #tpu.memory_space<vmem>>, %arg4: memref<128x128xbf16, #tpu.memory_space<vmem>>, %arg5: memref<1x128xf32, #tpu.memory_space<vmem>>, %arg6: memref<1x128xf32, #tpu.memory_space<vmem>>, %arg7: memref<1xf32, #tpu.memory_space<smem>>, %arg8: memref<1x128xf32, #tpu.memory_space<vmem>>) attributes {dimension_semantics = [#tpu.dimension_semantics<parallel>], iteration_bounds = array<i64: 2>, scalar_prefetch = 0 : i64, scratch_operands = 0 : i64, tpu.core_type = #tpu.core_type<tc>, window_params = [{transform_indices = @transform_0, window_bounds = array<i64: 128, 896>}, {pipeline_mode = #tpu.pipeline_mode<synchronous>, transform_indices = @transform_1, window_bounds = array<i64: 896, 128>}, {pipeline_mode = #tpu.pipeline_mode<synchronous>, transform_indices = @transform_2, window_bounds = array<i64: 1, 128>}, {pipeline_mode = #tpu.pipeline_mode<synchronous>, transform_indices = @transform_3, window_bounds = array<i64: 128, 128>}, {pipeline_mode = #tpu.pipeline_mode<synchronous>, transform_indices = @transform_4, window_bounds = array<i64: 1, 128>}, {pipeline_mode = #tpu.pipeline_mode<synchronous>, transform_indices = @transform_5, window_bounds = array<i64: 1, 128>}, {transform_indices = @transform_6, window_bounds = array<i64: 1>}, {transform_indices = @transform_7, window_bounds = array<i64: 1, 128>}]} {
    %c0 = arith.constant 0 : index
    %c0_0 = arith.constant 0 : index
    %0 = vector.load %arg1[%c0, %c0_0] : memref<128x896xbf16, #tpu.memory_space<vmem>>, vector<128x896xbf16>
    %c0_1 = arith.constant 0 : index
    %c0_2 = arith.constant 0 : index
    %1 = vector.load %arg2[%c0_1, %c0_2] : memref<896x128xbf16, #tpu.memory_space<vmem>>, vector<896x128xbf16>
    %cst = arith.constant dense<0.000000e+00> : vector<128x128xf32>
    %2 = tpu.matmul %0, %1, %cst {dimension_numbers = #tpu.dot_dimension_numbers<[1], [0], [0], [1], [0, 0, 1, 1], [], []>} : vector<128x896xbf16>, vector<896x128xbf16>, vector<128x128xf32> -> vector<128x128xf32>
    %c0_3 = arith.constant 0 : index
    %c0_4 = arith.constant 0 : index
    %3 = vector.load %arg3[%c0_3, %c0_4] : memref<1x128xf32, #tpu.memory_space<vmem>>, vector<1x128xf32>
    %4 = vector.broadcast %3 : vector<1x128xf32> to vector<128x128xf32>
    %5 = arith.addf %2, %4 : vector<128x128xf32>
    %cst_5 = arith.constant 0.000000e+00 : f32
    %6 = vector.broadcast %cst_5 : f32 to vector<128x128xf32>
    %7 = arith.maximumf %5, %6 : vector<128x128xf32>
    %8 = arith.truncf %7 : vector<128x128xf32> to vector<128x128xbf16>
    %c0_6 = arith.constant 0 : index
    %c0_7 = arith.constant 0 : index
    %9 = vector.load %arg4[%c0_6, %c0_7] : memref<128x128xbf16, #tpu.memory_space<vmem>>, vector<128x128xbf16>
    %cst_8 = arith.constant dense<0.000000e+00> : vector<128x128xf32>
    %10 = tpu.matmul %8, %9, %cst_8 {dimension_numbers = #tpu.dot_dimension_numbers<[1], [0], [0], [1], [0, 0, 1, 1], [], []>} : vector<128x128xbf16>, vector<128x128xbf16>, vector<128x128xf32> -> vector<128x128xf32>
    %c0_9 = arith.constant 0 : index
    %c0_10 = arith.constant 0 : index
    %11 = vector.load %arg5[%c0_9, %c0_10] : memref<1x128xf32, #tpu.memory_space<vmem>>, vector<1x128xf32>
    %12 = vector.broadcast %11 : vector<1x128xf32> to vector<128x128xf32>
    %13 = arith.addf %10, %12 : vector<128x128xf32>
    %cst_11 = arith.constant 0.000000e+00 : f32
    %14 = vector.broadcast %cst_11 : f32 to vector<128x128xf32>
    %15 = arith.maximumf %13, %14 : vector<128x128xf32>
    %c0_12 = arith.constant 0 : index
    %c0_13 = arith.constant 0 : index
    %16 = vector.load %arg6[%c0_12, %c0_13] : memref<1x128xf32, #tpu.memory_space<vmem>>, vector<1x128xf32>
    %cst_14 = arith.constant dense<0.000000e+00> : vector<1x128xf32>
    %17 = tpu.matmul %16, %15, %cst_14 {dimension_numbers = #tpu.dot_dimension_numbers<[1], [1], [0], [0], [0, 0, 1, 0], [], []>} : vector<1x128xf32>, vector<128x128xf32>, vector<1x128xf32> -> vector<1x128xf32>
    %c0_15 = arith.constant 0 : index
    %18 = memref.load %arg7[%c0_15] : memref<1xf32, #tpu.memory_space<smem>>
    %19 = vector.broadcast %18 : f32 to vector<1x128xf32>
    %20 = arith.addf %17, %19 : vector<1x128xf32>
    %c0_16 = arith.constant 0 : index
    %c0_17 = arith.constant 0 : index
    %21 = vector.load %arg8[%c0_16, %c0_17] : memref<1x128xf32, #tpu.memory_space<vmem>>, vector<1x128xf32>
    tpu.vector_store %arg8[%c0_16, %c0_17], %20 {strides = array<i32>} : memref<1x128xf32, #tpu.memory_space<vmem>>, vector<1x128xf32>,
    return
  }
  func.func @transform_0(%arg0: i32) -> (i32, i32) {
    %c0_i32 = arith.constant 0 : i32
    %c0_i32_0 = arith.constant 0 : i32
    return %arg0, %c0_i32 : i32, i32
  }
  func.func @transform_1(%arg0: i32) -> (i32, i32) {
    %c0_i32 = arith.constant 0 : i32
    %c0_i32_0 = arith.constant 0 : i32
    %c0_i32_1 = arith.constant 0 : i32
    return %c0_i32, %c0_i32_0 : i32, i32
  }
  func.func @transform_2(%arg0: i32) -> (i32, i32) {
    %c0_i32 = arith.constant 0 : i32
    %c0_i32_0 = arith.constant 0 : i32
    %c0_i32_1 = arith.constant 0 : i32
    return %c0_i32, %c0_i32_0 : i32, i32
  }
  func.func @transform_3(%arg0: i32) -> (i32, i32) {
    %c0_i32 = arith.constant 0 : i32
    %c0_i32_0 = arith.constant 0 : i32
    %c0_i32_1 = arith.constant 0 : i32
    return %c0_i32, %c0_i32_0 : i32, i32
  }
  func.func @transform_4(%arg0: i32) -> (i32, i32) {
    %c0_i32 = arith.constant 0 : i32
    %c0_i32_0 = arith.constant 0 : i32
    %c0_i32_1 = arith.constant 0 : i32
    return %c0_i32, %c0_i32_0 : i32, i32
  }
  func.func @transform_5(%arg0: i32) -> (i32, i32) {
    %c0_i32 = arith.constant 0 : i32
    %c0_i32_0 = arith.constant 0 : i32
    %c0_i32_1 = arith.constant 0 : i32
    return %c0_i32, %c0_i32_0 : i32, i32
  }
  func.func @transform_6(%arg0: i32) -> i32 {
    %c0_i32 = arith.constant 0 : i32
    %c0_i32_0 = arith.constant 0 : i32
    return %c0_i32 : i32
  }
  func.func @transform_7(%arg0: i32) -> (i32, i32) {
    %c0_i32 = arith.constant 0 : i32
    %c0_i32_0 = arith.constant 0 : i32
    return %c0_i32, %arg0 : i32, i32
  }
}

</mosaic_0001>

<llo_original>
// kernel: tpu_custom_call.1
$region0: #{tpu_custom_call.1}
  #allocation0 [shape = 'u32[]', space=smem, size = 0x4, offset = 0x4, fixed_abs, tag = 'smem constant byte address 0x4 - core index']
  #allocation1 [shape = 'u32[144,128]{1,0:T(1,128)}', space=vmem, size = 0x12000, scoped, tag = 'internal scratch']
  #allocation2 [shape = 'f32[1]{0:T(128)S(6)}', space=smem, size = 0x200, scoped, tag = 'scoped memory for tpu_custom_call.1']
  %s0 = inlined_call_operand.hbm [shape: bf16[256,896], index: 0, kind: input, shape index: {}]
  %s1 = inlined_call_operand.hbm [shape: bf16[896,128], index: 1, kind: input, shape index: {}]
  %s2 = inlined_call_operand.vmem [shape: f32[1,128], index: 2, kind: input, shape index: {}]
  %s3 = inlined_call_operand.hbm [shape: bf16[128,128], index: 3, kind: input, shape index: {}]
  %s4 = inlined_call_operand.vmem [shape: f32[1,128], index: 4, kind: input, shape index: {}]
  %s5 = inlined_call_operand.vmem [shape: f32[1,128], index: 5, kind: input, shape index: {}]
  %s6 = inlined_call_operand.<no memory space> [shape: f32[1], index: 6, kind: input, shape index: {}]
  %s7 = inlined_call_operand.hbm [shape: f32[1,256], index: 7, kind: output, shape index: {}]
  %s8 = sld [smem:[#allocation0]]
  $region73: #{tpu_custom_call.1} parent=0
    _
  %s10 = ssub.s32 1, %s8
  %s11 = scalar_select 0, %s10, %s8
  %12 = sst [smem:[#allocation2]] %s6
  $region1: #{tpu_custom_call.1} parent=0
    #allocation3 [shape = 'u8[458752]{0}', space=vmem, size = 0x70000, scoped, tag = 'input window, operand 0']
    #allocation4 [shape = 's32[2]{0}', space=sflag, size = 0x8, scoped, tag = 'scoped memory for tpu_custom_call.1']
    #allocation5 [shape = 's32[2]{0}', space=sflag, size = 0x8, scoped, tag = 'scoped memory for tpu_custom_call.1']
    #allocation6 [shape = 'u8[229376]{0}', space=vmem, size = 0x38000, scoped, tag = 'input window, operand 1, single buffered']
    #allocation7 [shape = 's32[1]{0}', space=sflag, size = 0x4, scoped, tag = 'scoped memory for tpu_custom_call.1']
    #allocation8 [shape = 'u8[32768]{0}', space=vmem, size = 0x8000, scoped, tag = 'input window, operand 3, single buffered']
    #allocation9 [shape = 'u8[1024]{0}', space=vmem, size = 0x400, scoped, tag = 'output window, operand 0']
    %13 = vsyncpa [#allocation4], 0
    %s14 = scalar_lea.sflag [#allocation4], 1
    %15 = vsyncpa %s14, 0
    %16 = vsyncpa [#allocation7], 0
    %17 = vsyncpa [#allocation5], 0
    %s18 = scalar_lea.sflag [#allocation5], 1
    %19 = vsyncpa %s18, 0
    loop: start=0, step=1, limit=4
    $region2: #{tpu_custom_call.1} parent=1 // loop_pre_header
      _
    $region3: #{tpu_custom_call.1} parent=1 // loop_header
      %s21 = sphi 0, %s25
      %p22 = scmp.ge.s32.totalorder %s21, 4
      %s31 = sphi 0, %s33
      %s34 = sphi 0, %s31
      %s35 = sphi 0, %s34
      %s51 = sphi 0, %s35
      %s55 = sphi 0, %s55
      %s57 = sphi 0, %s55
      %s58 = sphi 0, %s57
      %s72 = sphi 0, %s58
      %s76 = sphi 0, %s76
      %s78 = sphi 0, %s76
      %s79 = sphi 0, %s78
      %s93 = sphi 0, %s79
      %s97 = sphi 0, %s97
      %s99 = sphi 0, %s97
      %s100 = sphi 0, %s99
      %s114 = sphi 0, %s100
      %s118 = sphi 0, %s118
      %s120 = sphi 0, %s118
      %s121 = sphi 0, %s120
      %s135 = sphi 0, %s121
      %s139 = sphi 0, %s139
      %s141 = sphi 0, %s139
      %s142 = sphi 0, %s141
      %s156 = sphi 0, %s142
      %s160 = sphi 0, %s160
      %s162 = sphi 0, %s160
      %s163 = sphi 0, %s162
      %s177 = sphi 0, %s163
      %s183 = sphi 0, %s185
      %s186 = sphi 0, %s183
      %s187 = sphi 0, %s186
      %s203 = sphi 0, %s187
    $region4: #{tpu_custom_call.1} parent=1 // loop_header_branch
      %24 = sbr.rel (%p22) target = $region8
    $region5: #{tpu_custom_call.1} parent=1 // loop_body
      %s26 = ssub.s32 %s21, 1
      %s27 = ssub.s32 %s21, 2
      %s28 = sadd.s32 %s21, 1
      %s29 = ssub.s32 %s21, %s28
      %p30 = scmp.eq.s32.totalorder %s29, 0
      %s32 = sadd.s32 %s31, 1
      %s33 = scalar_select %p30, %s31, %s32
      %p36 = pneg %p30
      %p37 = scmp.eq.s32.totalorder %s21, 1
      %p38 = por %p36, %p37
      %p39 = scmp.ne.s32.totalorder %s31, %s34
      %p40 = scmp.eq.s32.totalorder %s21, 0
      %p41 = por %p39, %p40
      %p42 = scmp.ne.s32.totalorder %s31, %s34
      %p43 = scmp.eq.s32.totalorder %s26, 1
      %p44 = por %p42, %p43
      %p45 = scmp.ne.s32.totalorder %s34, %s35
      %p46 = scmp.eq.s32.totalorder %s26, 0
      %p47 = por %p45, %p46
      %p48 = scmp.ne.s32.totalorder %s34, %s35
      %p49 = scmp.eq.s32.totalorder %s27, 1
      %p50 = por %p48, %p49
      %p52 = scmp.ne.s32.totalorder %s35, %s51
      %p53 = scmp.eq.s32.totalorder %s27, 0
      %p54 = por %p52, %p53
      %s56 = sadd.s32 %s55, 1
      %p59 = scmp.eq.s32.totalorder %s21, 1
      %p60 = scmp.ne.s32.totalorder %s55, %s57
      %p61 = scmp.eq.s32.totalorder %s21, 0
      %p62 = por %p60, %p61
      %p63 = scmp.ne.s32.totalorder %s55, %s57
      %p64 = scmp.eq.s32.totalorder %s26, 1
      %p65 = por %p63, %p64
      %p66 = scmp.ne.s32.totalorder %s57, %s58
      %p67 = scmp.eq.s32.totalorder %s26, 0
      %p68 = por %p66, %p67
      %p69 = scmp.ne.s32.totalorder %s57, %s58
      %p70 = scmp.eq.s32.totalorder %s27, 1
      %p71 = por %p69, %p70
      %p73 = scmp.ne.s32.totalorder %s58, %s72
      %p74 = scmp.eq.s32.totalorder %s27, 0
      %p75 = por %p73, %p74
      %s77 = sadd.s32 %s76, 1
      %p80 = scmp.eq.s32.totalorder %s21, 1
      %p81 = scmp.ne.s32.totalorder %s76, %s78
      %p82 = scmp.eq.s32.totalorder %s21, 0
      %p83 = por %p81, %p82
      %p84 = scmp.ne.s32.totalorder %s76, %s78
      %p85 = scmp.eq.s32.totalorder %s26, 1
      %p86 = por %p84, %p85
      %p87 = scmp.ne.s32.totalorder %s78, %s79
      %p88 = scmp.eq.s32.totalorder %s26, 0
      %p89 = por %p87, %p88
      %p90 = scmp.ne.s32.totalorder %s78, %s79
      %p91 = scmp.eq.s32.totalorder %s27, 1
      %p92 = por %p90, %p91
      %p94 = scmp.ne.s32.totalorder %s79, %s93
      %p95 = scmp.eq.s32.totalorder %s27, 0
      %p96 = por %p94, %p95
      %s98 = sadd.s32 %s97, 1
      %p101 = scmp.eq.s32.totalorder %s21, 1
      %p102 = scmp.ne.s32.totalorder %s97, %s99
      %p103 = scmp.eq.s32.totalorder %s21, 0
      %p104 = por %p102, %p103
      %p105 = scmp.ne.s32.totalorder %s97, %s99
      %p106 = scmp.eq.s32.totalorder %s26, 1
      %p107 = por %p105, %p106
      %p108 = scmp.ne.s32.totalorder %s99, %s100
      %p109 = scmp.eq.s32.totalorder %s26, 0
      %p110 = por %p108, %p109
      %p111 = scmp.ne.s32.totalorder %s99, %s100
      %p112 = scmp.eq.s32.totalorder %s27, 1
      %p113 = por %p111, %p112
      %p115 = scmp.ne.s32.totalorder %s100, %s114
      %p116 = scmp.eq.s32.totalorder %s27, 0
      %p117 = por %p115, %p116
      %s119 = sadd.s32 %s118, 1
      %p122 = scmp.eq.s32.totalorder %s21, 1
      %p123 = scmp.ne.s32.totalorder %s118, %s120
      %p124 = scmp.eq.s32.totalorder %s21, 0
      %p125 = por %p123, %p124
      %p126 = scmp.ne.s32.totalorder %s118, %s120
      %p127 = scmp.eq.s32.totalorder %s26, 1
      %p128 = por %p126, %p127
      %p129 = scmp.ne.s32.totalorder %s120, %s121
      %p130 = scmp.eq.s32.totalorder %s26, 0
      %p131 = por %p129, %p130
      %p132 = scmp.ne.s32.totalorder %s120, %s121
      %p133 = scmp.eq.s32.totalorder %s27, 1
      %p134 = por %p132, %p133
      %p136 = scmp.ne.s32.totalorder %s121, %s135
      %p137 = scmp.eq.s32.totalorder %s27, 0
      %p138 = por %p136, %p137
      %s140 = sadd.s32 %s139, 1
      %p143 = scmp.eq.s32.totalorder %s21, 1
      %p144 = scmp.ne.s32.totalorder %s139, %s141
      %p145 = scmp.eq.s32.totalorder %s21, 0
      %p146 = por %p144, %p145
      %p147 = scmp.ne.s32.totalorder %s139, %s141
      %p148 = scmp.eq.s32.totalorder %s26, 1
      %p149 = por %p147, %p148
      %p150 = scmp.ne.s32.totalorder %s141, %s142
      %p151 = scmp.eq.s32.totalorder %s26, 0
      %p152 = por %p150, %p151
      %p153 = scmp.ne.s32.totalorder %s141, %s142
      %p154 = scmp.eq.s32.totalorder %s27, 1
      %p155 = por %p153, %p154
      %p157 = scmp.ne.s32.totalorder %s142, %s156
      %p158 = scmp.eq.s32.totalorder %s27, 0
      %p159 = por %p157, %p158
      %s161 = sadd.s32 %s160, 1
      %p164 = scmp.eq.s32.totalorder %s21, 1
      %p165 = scmp.ne.s32.totalorder %s160, %s162
      %p166 = scmp.eq.s32.totalorder %s21, 0
      %p167 = por %p165, %p166
      %p168 = scmp.ne.s32.totalorder %s160, %s162
      %p169 = scmp.eq.s32.totalorder %s26, 1
      %p170 = por %p168, %p169
      %p171 = scmp.ne.s32.totalorder %s162, %s163
      %p172 = scmp.eq.s32.totalorder %s26, 0
      %p173 = por %p171, %p172
      %p174 = scmp.ne.s32.totalorder %s162, %s163
      %p175 = scmp.eq.s32.totalorder %s27, 1
      %p176 = por %p174, %p175
      %p178 = scmp.ne.s32.totalorder %s163, %s177
      %p179 = scmp.eq.s32.totalorder %s27, 0
      %p180 = por %p178, %p179
      %s181 = ssub.s32 %s21, %s28
      %p182 = scmp.eq.s32.totalorder %s181, 0
      %s184 = sadd.s32 %s183, 1
      %s185 = scalar_select %p182, %s183, %s184
      %p188 = pneg %p182
      %p189 = scmp.eq.s32.totalorder %s21, 1
      %p190 = por %p188, %p189
      %p191 = scmp.ne.s32.totalorder %s183, %s186
      %p192 = scmp.eq.s32.totalorder %s21, 0
      %p193 = por %p191, %p192
      %p194 = scmp.ne.s32.totalorder %s183, %s186
      %p195 = scmp.eq.s32.totalorder %s26, 1
      %p196 = por %p194, %p195
      %p197 = scmp.ne.s32.totalorder %s186, %s187
      %p198 = scmp.eq.s32.totalorder %s26, 0
      %p199 = por %p197, %p198
      %p200 = scmp.ne.s32.totalorder %s186, %s187
      %p201 = scmp.eq.s32.totalorder %s27, 1
      %p202 = por %p200, %p201
      %p204 = scmp.ne.s32.totalorder %s187, %s203
      %p205 = scmp.eq.s32.totalorder %s27, 0
      %p206 = por %p204, %p205
      %p207 = scmp.le.s32.totalorder 1, %s21
      %p208 = scmp.lt.s32.totalorder %s21, 3
      %p209 = pnand %p207, %p208
      %p210 = pneg %p209
      // Predicated region
      $region9: #{tpu_custom_call.1} parent=5 // pred_check
        _
      $region10: #{tpu_custom_call.1} parent=5 // pred_check_branch
        %212 = sbr.rel (%p209) target = $region12
      $region11: #{tpu_custom_call.1} parent=5 // pred_region
        %s213 = ssub.s32 %s21, 1
        // Predicated region
        $region13: #{tpu_custom_call.1} parent=11 // pred_check
          %p214 = pneg %p68
        $region14: #{tpu_custom_call.1} parent=11 // pred_check_branch
          %216 = sbr.rel (%p214) target = $region16
        $region15: #{tpu_custom_call.1} parent=11 // pred_region
          %s218 = ssub.s32 7168, 7168
          %219 = vsyncadd [#allocation7], %s218
          %s220 = sshll.u32 [#allocation6], 4
          %s221 = int_to_ptr.vmem [resolvable:$true] %s220
          %226 = dma.hbm_to_vmem [thread:$0]  %s1, 7168, %s221, [#allocation7], 64, 64, 4
        $region16: #{tpu_custom_call.1} parent=11 // pred_fallthru
          _
        // Predicated region
        $region17: #{tpu_custom_call.1} parent=11 // pred_check
          %p227 = pneg %p89
        $region18: #{tpu_custom_call.1} parent=11 // pred_check_branch
          %229 = sbr.rel (%p227) target = $region20
        $region19: #{tpu_custom_call.1} parent=11 // pred_region
          _
        $region20: #{tpu_custom_call.1} parent=11 // pred_fallthru
          _
        // Predicated region
        $region21: #{tpu_custom_call.1} parent=11 // pred_check
          %p230 = pneg %p110
        $region22: #{tpu_custom_call.1} parent=11 // pred_check_branch
          %232 = sbr.rel (%p230) target = $region24
        $region23: #{tpu_custom_call.1} parent=11 // pred_region
          %s234 = ssub.s32 1024, 1024
          %235 = vsyncadd [#allocation7], %s234
          %s236 = sshll.u32 [#allocation8], 4
          %s237 = int_to_ptr.vmem [resolvable:$true] %s236
          %242 = dma.hbm_to_vmem [thread:$0]  %s3, 1024, %s237, [#allocation7], 64, 64, 4
        $region24: #{tpu_custom_call.1} parent=11 // pred_fallthru
          _
        // Predicated region
        $region25: #{tpu_custom_call.1} parent=11 // pred_check
          %p243 = pneg %p131
        $region26: #{tpu_custom_call.1} parent=11 // pred_check_branch
          %245 = sbr.rel (%p243) target = $region28
        $region27: #{tpu_custom_call.1} parent=11 // pred_region
          _
        $region28: #{tpu_custom_call.1} parent=11 // pred_fallthru
          _
        // Predicated region
        $region29: #{tpu_custom_call.1} parent=11 // pred_check
          %p246 = pneg %p152
        $region30: #{tpu_custom_call.1} parent=11 // pred_check_branch
          %248 = sbr.rel (%p246) target = $region32
        $region31: #{tpu_custom_call.1} parent=11 // pred_region
          _
        $region32: #{tpu_custom_call.1} parent=11 // pred_fallthru
          _
        // Predicated region
        $region33: #{tpu_custom_call.1} parent=11 // pred_check
          %p249 = pneg %p173
        $region34: #{tpu_custom_call.1} parent=11 // pred_check_branch
          %251 = sbr.rel (%p249) target = $region36
        $region35: #{tpu_custom_call.1} parent=11 // pred_region
          _
        $region36: #{tpu_custom_call.1} parent=11 // pred_fallthru
          _
      $region12: #{tpu_custom_call.1} parent=5 // pred_fallthru
        _
      %p252 = scmp.lt.s32.totalorder %s21, 2
      // Predicated region
      $region37: #{tpu_custom_call.1} parent=5 // pred_check
        %p253 = pneg %p252
      $region38: #{tpu_custom_call.1} parent=5 // pred_check_branch
        %255 = sbr.rel (%p253) target = $region40
      $region39: #{tpu_custom_call.1} parent=5 // pred_region
        // Predicated region
        $region41: #{tpu_custom_call.1} parent=39 // pred_check
          %p256 = pneg %p41
        $region42: #{tpu_custom_call.1} parent=39 // pred_check_branch
          %258 = sbr.rel (%p256) target = $region44
        $region43: #{tpu_custom_call.1} parent=39 // pred_region
          %s259 = sand.u32 %s31, 1
          %s260 = scalar_lea.sflag [#allocation4], %s259
          %s261 = sand.u32 %s31, 1
          %s262 = smul.addr %s261, 448
          %s263 = scalar_lea.vmem [#allocation3], %s262
          %s264 = smul.u32 16, %s21
          %s266 = ssub.s32 7168, 7168
          %267 = vsyncadd %s260, %s266
          %s268 = smul.addr %s264, 7
          %s269 = smul.addr %s268, 64
          %s270 = scalar_lea.hbm %s0, %s269
          %s271 = sshll.u32 %s263, 4
          %s272 = int_to_ptr.vmem [resolvable:$true] %s271
          %277 = dma.hbm_to_vmem [thread:$0]  %s270, 7168, %s272, %s260, 448, 448, 28
        $region44: #{tpu_custom_call.1} parent=39 // pred_fallthru
          _
      $region40: #{tpu_custom_call.1} parent=5 // pred_fallthru
        _
      %p278 = scmp.le.s32.totalorder 1, %s21
      %p279 = scmp.lt.s32.totalorder %s21, 3
      %p280 = pnand %p278, %p279
      %p281 = pneg %p280
      // Predicated region
      $region45: #{tpu_custom_call.1} parent=5 // pred_check
        _
      $region46: #{tpu_custom_call.1} parent=5 // pred_check_branch
        %283 = sbr.rel (%p280) target = $region48
      $region47: #{tpu_custom_call.1} parent=5 // pred_region
        %s284 = ssub.s32 %s21, 1
        %s285 = sand.u32 %s34, 1
        %s286 = scalar_lea.sflag [#allocation4], %s285
        %s287 = sand.u32 %s34, 1
        %s288 = smul.addr %s287, 448
        %s289 = scalar_lea.vmem [#allocation3], %s288
        // Predicated region
        $region49: #{tpu_custom_call.1} parent=47 // pred_check
          %p290 = pneg %p47
        $region50: #{tpu_custom_call.1} parent=47 // pred_check_branch
          %292 = sbr.rel (%p290) target = $region52
        $region51: #{tpu_custom_call.1} parent=47 // pred_region
          %293 = dma.done %s286, 7168
        $region52: #{tpu_custom_call.1} parent=47 // pred_fallthru
          _
        // Predicated region
        $region53: #{tpu_custom_call.1} parent=47 // pred_check
          %p294 = pneg %p68
        $region54: #{tpu_custom_call.1} parent=47 // pred_check_branch
          %296 = sbr.rel (%p294) target = $region56
        $region55: #{tpu_custom_call.1} parent=47 // pred_region
          %297 = dma.done [#allocation7], 7168
        $region56: #{tpu_custom_call.1} parent=47 // pred_fallthru
          _
        // Predicated region
        $region57: #{tpu_custom_call.1} parent=47 // pred_check
          %p298 = pneg %p110
        $region58: #{tpu_custom_call.1} parent=47 // pred_check_branch
          %300 = sbr.rel (%p298) target = $region60
        $region59: #{tpu_custom_call.1} parent=47 // pred_region
          %301 = dma.done [#allocation7], 1024
        $region60: #{tpu_custom_call.1} parent=47 // pred_fallthru
          _
        %s302 = sand.u32 %s34, 1
        %s303 = scalar_lea.sflag [#allocation4], %s302
        %s304 = sand.u32 %s34, 1
        %s305 = smul.addr %s304, 448
        %s306 = scalar_lea.vmem [#allocation3], %s305
        %p307 = pneg %p47
        %p308 = pneg %p44
        %p309 = pneg %p68
        %p310 = pneg %p65
        %p311 = pneg %p89
        %p312 = pneg %p86
        %p313 = pneg %p110
        %p314 = pneg %p107
        %p315 = pneg %p131
        %p316 = pneg %p128
        %p317 = pneg %p152
        %p318 = pneg %p149
        %p319 = pneg %p173
        %p320 = pneg %p170
        %p321 = pneg %p199
        %p322 = pneg %p196
        %s323 = sand.u32 %s186, 1
        %s324 = scalar_lea.sflag [#allocation5], %s323
        %s325 = sand.u32 %s186, 1
        %s326 = scalar_lea.vmem [#allocation9], %s325
        %s327 = smul.u32 16, %s26
        %v329 = vld [vmem:[%s289] sm:$0xff]
        %v330 = vld [vmem:[%s289 + $0x8] sm:$0xff]
        %v331 = vld [vmem:[%s289 + $0x10] sm:$0xff]
        %v332 = vld [vmem:[%s289 + $0x18] sm:$0xf]
        %v333 = vld [vmem:[%s289 + $0x1c] sm:$0xff]
        %v334 = vld [vmem:[%s289 + $0x24] sm:$0xff]
        %v335 = vld [vmem:[%s289 + $0x2c] sm:$0xff]
        %v336 = vld [vmem:[%s289 + $0x34] sm:$0xf]
        %v337 = vld [vmem:[%s289 + $0x38] sm:$0xff]
        %v338 = vld [vmem:[%s289 + $0x40] sm:$0xff]
        %v339 = vld [vmem:[%s289 + $0x48] sm:$0xff]
        %v340 = vld [vmem:[%s289 + $0x50] sm:$0xf]
        %v341 = vld [vmem:[%s289 + $0x54] sm:$0xff]
        %v342 = vld [vmem:[%s289 + $0x5c] sm:$0xff]
        %v343 = vld [vmem:[%s289 + $0x64] sm:$0xff]
        %v344 = vld [vmem:[%s289 + $0x6c] sm:$0xf]
        %v345 = vld [vmem:[%s289 + $0x70] sm:$0xff]
        %v346 = vld [vmem:[%s289 + $0x78] sm:$0xff]
        %v347 = vld [vmem:[%s289 + $0x80] sm:$0xff]
        %v348 = vld [vmem:[%s289 + $0x88] sm:$0xf]
        %v349 = vld [vmem:[%s289 + $0x8c] sm:$0xff]
        %v350 = vld [vmem:[%s289 + $0x94] sm:$0xff]
        %v351 = vld [vmem:[%s289 + $0x9c] sm:$0xff]
        %v352 = vld [vmem:[%s289 + $0xa4] sm:$0xf]
        %v353 = vld [vmem:[%s289 + $0xa8] sm:$0xff]
        %v354 = vld [vmem:[%s289 + $0xb0] sm:$0xff]
        %v355 = vld [vmem:[%s289 + $0xb8] sm:$0xff]
        %v356 = vld [vmem:[%s289 + $0xc0] sm:$0xf]
        %v357 = vld [vmem:[%s289 + $0xc4] sm:$0xff]
        %v358 = vld [vmem:[%s289 + $0xcc] sm:$0xff]
        %v359 = vld [vmem:[%s289 + $0xd4] sm:$0xff]
        %v360 = vld [vmem:[%s289 + $0xdc] sm:$0xf]
        %v361 = vld [vmem:[%s289 + $0xe0] sm:$0xff]
        %v362 = vld [vmem:[%s289 + $0xe8] sm:$0xff]
        %v363 = vld [vmem:[%s289 + $0xf0] sm:$0xff]
        %v364 = vld [vmem:[%s289 + $0xf8] sm:$0xf]
        %v365 = vld [vmem:[%s289 + $0xfc] sm:$0xff]
        %v366 = vld [vmem:[%s289 + $0x104] sm:$0xff]
        %v367 = vld [vmem:[%s289 + $0x10c] sm:$0xff]
        %v368 = vld [vmem:[%s289 + $0x114] sm:$0xf]
        %v369 = vld [vmem:[%s289 + $0x118] sm:$0xff]
        %v370 = vld [vmem:[%s289 + $0x120] sm:$0xff]
        %v371 = vld [vmem:[%s289 + $0x128] sm:$0xff]
        %v372 = vld [vmem:[%s289 + $0x130] sm:$0xf]
        %v373 = vld [vmem:[%s289 + $0x134] sm:$0xff]
        %v374 = vld [vmem:[%s289 + $0x13c] sm:$0xff]
        %v375 = vld [vmem:[%s289 + $0x144] sm:$0xff]
        %v376 = vld [vmem:[%s289 + $0x14c] sm:$0xf]
        %v377 = vld [vmem:[%s289 + $0x150] sm:$0xff]
        %v378 = vld [vmem:[%s289 + $0x158] sm:$0xff]
        %v379 = vld [vmem:[%s289 + $0x160] sm:$0xff]
        %v380 = vld [vmem:[%s289 + $0x168] sm:$0xf]
        %v381 = vld [vmem:[%s289 + $0x16c] sm:$0xff]
        %v382 = vld [vmem:[%s289 + $0x174] sm:$0xff]
        %v383 = vld [vmem:[%s289 + $0x17c] sm:$0xff]
        %v384 = vld [vmem:[%s289 + $0x184] sm:$0xf]
        %v385 = vld [vmem:[%s289 + $0x188] sm:$0xff]
        %v386 = vld [vmem:[%s289 + $0x190] sm:$0xff]
        %v387 = vld [vmem:[%s289 + $0x198] sm:$0xff]
        %v388 = vld [vmem:[%s289 + $0x1a0] sm:$0xf]
        %v389 = vld [vmem:[%s289 + $0x1a4] sm:$0xff]
        %v390 = vld [vmem:[%s289 + $0x1ac] sm:$0xff]
        %v391 = vld [vmem:[%s289 + $0x1b4] sm:$0xff]
        %v392 = vld [vmem:[%s289 + $0x1bc] sm:$0xf]
        %v393 = vld [vmem:[#allocation6] sm:$0xf]
        %v394 = vld [vmem:[#allocation6 + $0x4] sm:$0xf]
        %v395 = vld [vmem:[#allocation6 + $0x8] sm:$0xf]
        %v396 = vld [vmem:[#allocation6 + $0xc] sm:$0xf]
        %v397 = vld [vmem:[#allocation6 + $0x10] sm:$0xf]
        %v398 = vld [vmem:[#allocation6 + $0x14] sm:$0xf]
        %v399 = vld [vmem:[#allocation6 + $0x18] sm:$0xf]
        %v400 = vld [vmem:[#allocation6 + $0x1c] sm:$0xf]
        %v401 = vld [vmem:[#allocation6 + $0x20] sm:$0xf]
        %v402 = vld [vmem:[#allocation6 + $0x24] sm:$0xf]
        %v403 = vld [vmem:[#allocation6 + $0x28] sm:$0xf]
        %v404 = vld [vmem:[#allocation6 + $0x2c] sm:$0xf]
        %v405 = vld [vmem:[#allocation6 + $0x30] sm:$0xf]
        %v406 = vld [vmem:[#allocation6 + $0x34] sm:$0xf]
        %v407 = vld [vmem:[#allocation6 + $0x38] sm:$0xf]
        %v408 = vld [vmem:[#allocation6 + $0x3c] sm:$0xf]
        %v409 = vld [vmem:[#allocation6 + $0x40] sm:$0xf]
        %v410 = vld [vmem:[#allocation6 + $0x44] sm:$0xf]
        %v411 = vld [vmem:[#allocation6 + $0x48] sm:$0xf]
        %v412 = vld [vmem:[#allocation6 + $0x4c] sm:$0xf]
        %v413 = vld [vmem:[#allocation6 + $0x50] sm:$0xf]
        %v414 = vld [vmem:[#allocation6 + $0x54] sm:$0xf]
        %v415 = vld [vmem:[#allocation6 + $0x58] sm:$0xf]
        %v416 = vld [vmem:[#allocation6 + $0x5c] sm:$0xf]
        %v417 = vld [vmem:[#allocation6 + $0x60] sm:$0xf]
        %v418 = vld [vmem:[#allocation6 + $0x64] sm:$0xf]
        %v419 = vld [vmem:[#allocation6 + $0x68] sm:$0xf]
        %v420 = vld [vmem:[#allocation6 + $0x6c] sm:$0xf]
        %v421 = vld [vmem:[#allocation6 + $0x70] sm:$0xf]
        %v422 = vld [vmem:[#allocation6 + $0x74] sm:$0xf]
        %v423 = vld [vmem:[#allocation6 + $0x78] sm:$0xf]
        %v424 = vld [vmem:[#allocation6 + $0x7c] sm:$0xf]
        %v425 = vld [vmem:[#allocation6 + $0x80] sm:$0xf]
        %v426 = vld [vmem:[#allocation6 + $0x84] sm:$0xf]
        %v427 = vld [vmem:[#allocation6 + $0x88] sm:$0xf]
        %v428 = vld [vmem:[#allocation6 + $0x8c] sm:$0xf]
        %v429 = vld [vmem:[#allocation6 + $0x90] sm:$0xf]
        %v430 = vld [vmem:[#allocation6 + $0x94] sm:$0xf]
        %v431 = vld [vmem:[#allocation6 + $0x98] sm:$0xf]
        %v432 = vld [vmem:[#allocation6 + $0x9c] sm:$0xf]
        %v433 = vld [vmem:[#allocation6 + $0xa0] sm:$0xf]
        %v434 = vld [vmem:[#allocation6 + $0xa4] sm:$0xf]
        %v435 = vld [vmem:[#allocation6 + $0xa8] sm:$0xf]
        %v436 = vld [vmem:[#allocation6 + $0xac] sm:$0xf]
        %v437 = vld [vmem:[#allocation6 + $0xb0] sm:$0xf]
        %v438 = vld [vmem:[#allocation6 + $0xb4] sm:$0xf]
        %v439 = vld [vmem:[#allocation6 + $0xb8] sm:$0xf]
        %v440 = vld [vmem:[#allocation6 + $0xbc] sm:$0xf]
        %v441 = vld [vmem:[#allocation6 + $0xc0] sm:$0xf]
        %v442 = vld [vmem:[#allocation6 + $0xc4] sm:$0xf]
        %v443 = vld [vmem:[#allocation6 + $0xc8] sm:$0xf]
        %v444 = vld [vmem:[#allocation6 + $0xcc] sm:$0xf]
        %v445 = vld [vmem:[#allocation6 + $0xd0] sm:$0xf]
        %v446 = vld [vmem:[#allocation6 + $0xd4] sm:$0xf]
        %v447 = vld [vmem:[#allocation6 + $0xd8] sm:$0xf]
        %v448 = vld [vmem:[#allocation6 + $0xdc] sm:$0xf]
        %v449 = vld [vmem:[#allocation6 + $0xe0] sm:$0xf]
        %v450 = vld [vmem:[#allocation6 + $0xe4] sm:$0xf]
        %v451 = vld [vmem:[#allocation6 + $0xe8] sm:$0xf]
        %v452 = vld [vmem:[#allocation6 + $0xec] sm:$0xf]
        %v453 = vld [vmem:[#allocation6 + $0xf0] sm:$0xf]
        %v454 = vld [vmem:[#allocation6 + $0xf4] sm:$0xf]
        %v455 = vld [vmem:[#allocation6 + $0xf8] sm:$0xf]
        %v456 = vld [vmem:[#allocation6 + $0xfc] sm:$0xf]
        %v457 = vld [vmem:[#allocation6 + $0x100] sm:$0xf]
        %v458 = vld [vmem:[#allocation6 + $0x104] sm:$0xf]
        %v459 = vld [vmem:[#allocation6 + $0x108] sm:$0xf]
        %v460 = vld [vmem:[#allocation6 + $0x10c] sm:$0xf]
        %v461 = vld [vmem:[#allocation6 + $0x110] sm:$0xf]
        %v462 = vld [vmem:[#allocation6 + $0x114] sm:$0xf]
        %v463 = vld [vmem:[#allocation6 + $0x118] sm:$0xf]
        %v464 = vld [vmem:[#allocation6 + $0x11c] sm:$0xf]
        %v465 = vld [vmem:[#allocation6 + $0x120] sm:$0xf]
        %v466 = vld [vmem:[#allocation6 + $0x124] sm:$0xf]
        %v467 = vld [vmem:[#allocation6 + $0x128] sm:$0xf]
        %v468 = vld [vmem:[#allocation6 + $0x12c] sm:$0xf]
        %v469 = vld [vmem:[#allocation6 + $0x130] sm:$0xf]
        %v470 = vld [vmem:[#allocation6 + $0x134] sm:$0xf]
        %v471 = vld [vmem:[#allocation6 + $0x138] sm:$0xf]
        %v472 = vld [vmem:[#allocation6 + $0x13c] sm:$0xf]
        %v473 = vld [vmem:[#allocation6 + $0x140] sm:$0xf]
        %v474 = vld [vmem:[#allocation6 + $0x144] sm:$0xf]
        %v475 = vld [vmem:[#allocation6 + $0x148] sm:$0xf]
        %v476 = vld [vmem:[#allocation6 + $0x14c] sm:$0xf]
        %v477 = vld [vmem:[#allocation6 + $0x150] sm:$0xf]
        %v478 = vld [vmem:[#allocation6 + $0x154] sm:$0xf]
        %v479 = vld [vmem:[#allocation6 + $0x158] sm:$0xf]
        %v480 = vld [vmem:[#allocation6 + $0x15c] sm:$0xf]
        %v481 = vld [vmem:[#allocation6 + $0x160] sm:$0xf]
        %v482 = vld [vmem:[#allocation6 + $0x164] sm:$0xf]
        %v483 = vld [vmem:[#allocation6 + $0x168] sm:$0xf]
        %v484 = vld [vmem:[#allocation6 + $0x16c] sm:$0xf]
        %v485 = vld [vmem:[#allocation6 + $0x170] sm:$0xf]
        %v486 = vld [vmem:[#allocation6 + $0x174] sm:$0xf]
        %v487 = vld [vmem:[#allocation6 + $0x178] sm:$0xf]
        %v488 = vld [vmem:[#allocation6 + $0x17c] sm:$0xf]
        %v489 = vld [vmem:[#allocation6 + $0x180] sm:$0xf]
        %v490 = vld [vmem:[#allocation6 + $0x184] sm:$0xf]
        %v491 = vld [vmem:[#allocation6 + $0x188] sm:$0xf]
        %v492 = vld [vmem:[#allocation6 + $0x18c] sm:$0xf]
        %v493 = vld [vmem:[#allocation6 + $0x190] sm:$0xf]
        %v494 = vld [vmem:[#allocation6 + $0x194] sm:$0xf]
        %v495 = vld [vmem:[#allocation6 + $0x198] sm:$0xf]
        %v496 = vld [vmem:[#allocation6 + $0x19c] sm:$0xf]
        %v497 = vld [vmem:[#allocation6 + $0x1a0] sm:$0xf]
        %v498 = vld [vmem:[#allocation6 + $0x1a4] sm:$0xf]
        %v499 = vld [vmem:[#allocation6 + $0x1a8] sm:$0xf]
        %v500 = vld [vmem:[#allocation6 + $0x1ac] sm:$0xf]
        %v501 = vld [vmem:[#allocation6 + $0x1b0] sm:$0xf]
        %v502 = vld [vmem:[#allocation6 + $0x1b4] sm:$0xf]
        %v503 = vld [vmem:[#allocation6 + $0x1b8] sm:$0xf]
        %v504 = vld [vmem:[#allocation6 + $0x1bc] sm:$0xf]
        %v505 = vld [vmem:[%s2] sm:$0x1]
        %v507 = vlaneseq
        %v508 = vshrl.u32 %v507, 7
        %v509 = vsub.s32 0, %v508
        %v510 = vrot.slane %v505, %v509
        %v576 = vunpack.c.l.b16 %v329
        %v577 = vunpack.c.h.b16 %v329
        %v578 = vunpack.c.l.b16 %v330
        %v579 = vunpack.c.h.b16 %v330
        %v580 = vunpack.c.l.b16 %v331
        %v581 = vunpack.c.h.b16 %v331
        %v582 = vunpack.c.l.b16 %v332
        %v583 = vunpack.c.l.b16 %v333
        %v584 = vunpack.c.h.b16 %v333
        %v585 = vunpack.c.l.b16 %v334
        %v586 = vunpack.c.h.b16 %v334
        %v587 = vunpack.c.l.b16 %v335
        %v588 = vunpack.c.h.b16 %v335
        %v589 = vunpack.c.l.b16 %v336
        %v590 = vunpack.c.l.b16 %v337
        %v591 = vunpack.c.h.b16 %v337
        %v592 = vunpack.c.l.b16 %v338
        %v593 = vunpack.c.h.b16 %v338
        %v594 = vunpack.c.l.b16 %v339
        %v595 = vunpack.c.h.b16 %v339
        %v596 = vunpack.c.l.b16 %v340
        %v597 = vunpack.c.l.b16 %v341
        %v598 = vunpack.c.h.b16 %v341
        %v599 = vunpack.c.l.b16 %v342
        %v600 = vunpack.c.h.b16 %v342
        %v601 = vunpack.c.l.b16 %v343
        %v602 = vunpack.c.h.b16 %v343
        %v603 = vunpack.c.l.b16 %v344
        %v604 = vunpack.c.l.b16 %v345
        %v605 = vunpack.c.h.b16 %v345
        %v606 = vunpack.c.l.b16 %v346
        %v607 = vunpack.c.h.b16 %v346
        %v608 = vunpack.c.l.b16 %v347
        %v609 = vunpack.c.h.b16 %v347
        %v610 = vunpack.c.l.b16 %v348
        %v611 = vunpack.c.l.b16 %v349
        %v612 = vunpack.c.h.b16 %v349
        %v613 = vunpack.c.l.b16 %v350
        %v614 = vunpack.c.h.b16 %v350
        %v615 = vunpack.c.l.b16 %v351
        %v616 = vunpack.c.h.b16 %v351
        %v617 = vunpack.c.l.b16 %v352
        %v618 = vunpack.c.l.b16 %v353
        %v619 = vunpack.c.h.b16 %v353
        %v620 = vunpack.c.l.b16 %v354
        %v621 = vunpack.c.h.b16 %v354
        %v622 = vunpack.c.l.b16 %v355
        %v623 = vunpack.c.h.b16 %v355
        %v624 = vunpack.c.l.b16 %v356
        %v625 = vunpack.c.l.b16 %v357
        %v626 = vunpack.c.h.b16 %v357
        %v627 = vunpack.c.l.b16 %v358
        %v628 = vunpack.c.h.b16 %v358
        %v629 = vunpack.c.l.b16 %v359
        %v630 = vunpack.c.h.b16 %v359
        %v631 = vunpack.c.l.b16 %v360
        %v632 = vunpack.c.l.b16 %v361
        %v633 = vunpack.c.h.b16 %v361
        %v634 = vunpack.c.l.b16 %v362
        %v635 = vunpack.c.h.b16 %v362
        %v636 = vunpack.c.l.b16 %v363
        %v637 = vunpack.c.h.b16 %v363
        %v638 = vunpack.c.l.b16 %v364
        %v639 = vunpack.c.l.b16 %v365
        %v640 = vunpack.c.h.b16 %v365
        %v641 = vunpack.c.l.b16 %v366
        %v642 = vunpack.c.h.b16 %v366
        %v643 = vunpack.c.l.b16 %v367
        %v644 = vunpack.c.h.b16 %v367
        %v645 = vunpack.c.l.b16 %v368
        %v646 = vunpack.c.l.b16 %v369
        %v647 = vunpack.c.h.b16 %v369
        %v648 = vunpack.c.l.b16 %v370
        %v649 = vunpack.c.h.b16 %v370
        %v650 = vunpack.c.l.b16 %v371
        %v651 = vunpack.c.h.b16 %v371
        %v652 = vunpack.c.l.b16 %v372
        %v653 = vunpack.c.l.b16 %v373
        %v654 = vunpack.c.h.b16 %v373
        %v655 = vunpack.c.l.b16 %v374
        %v656 = vunpack.c.h.b16 %v374
        %v657 = vunpack.c.l.b16 %v375
        %v658 = vunpack.c.h.b16 %v375
        %v659 = vunpack.c.l.b16 %v376
        %v660 = vunpack.c.l.b16 %v377
        %v661 = vunpack.c.h.b16 %v377
        %v662 = vunpack.c.l.b16 %v378
        %v663 = vunpack.c.h.b16 %v378
        %v664 = vunpack.c.l.b16 %v379
        %v665 = vunpack.c.h.b16 %v379
        %v666 = vunpack.c.l.b16 %v380
        %v667 = vunpack.c.l.b16 %v381
        %v668 = vunpack.c.h.b16 %v381
        %v669 = vunpack.c.l.b16 %v382
        %v670 = vunpack.c.h.b16 %v382
        %v671 = vunpack.c.l.b16 %v383
        %v672 = vunpack.c.h.b16 %v383
        %v673 = vunpack.c.l.b16 %v384
        %v674 = vunpack.c.l.b16 %v385
        %v675 = vunpack.c.h.b16 %v385
        %v676 = vunpack.c.l.b16 %v386
        %v677 = vunpack.c.h.b16 %v386
        %v678 = vunpack.c.l.b16 %v387
        %v679 = vunpack.c.h.b16 %v387
        %v680 = vunpack.c.l.b16 %v388
        %v681 = vunpack.c.l.b16 %v389
        %v682 = vunpack.c.h.b16 %v389
        %v683 = vunpack.c.l.b16 %v390
        %v684 = vunpack.c.h.b16 %v390
        %v685 = vunpack.c.l.b16 %v391
        %v686 = vunpack.c.h.b16 %v391
        %v687 = vunpack.c.l.b16 %v392
        %v688 = vpack.c.b16 %v583, %v576
        %v689 = vpack.c.b16 %v584, %v577
        %v690 = vpack.c.b16 %v585, %v578
        %v691 = vpack.c.b16 %v586, %v579
        %v692 = vpack.c.b16 %v587, %v580
        %v693 = vpack.c.b16 %v588, %v581
        %v694 = vpack.c.b16 %v589, %v582
        %v695 = vpack.c.b16 %v597, %v590
        %v696 = vpack.c.b16 %v598, %v591
        %v697 = vpack.c.b16 %v599, %v592
        %v698 = vpack.c.b16 %v600, %v593
        %v699 = vpack.c.b16 %v601, %v594
        %v700 = vpack.c.b16 %v602, %v595
        %v701 = vpack.c.b16 %v603, %v596
        %v702 = vpack.c.b16 %v611, %v604
        %v703 = vpack.c.b16 %v612, %v605
        %v704 = vpack.c.b16 %v613, %v606
        %v705 = vpack.c.b16 %v614, %v607
        %v706 = vpack.c.b16 %v615, %v608
        %v707 = vpack.c.b16 %v616, %v609
        %v708 = vpack.c.b16 %v617, %v610
        %v709 = vpack.c.b16 %v625, %v618
        %v710 = vpack.c.b16 %v626, %v619
        %v711 = vpack.c.b16 %v627, %v620
        %v712 = vpack.c.b16 %v628, %v621
        %v713 = vpack.c.b16 %v629, %v622
        %v714 = vpack.c.b16 %v630, %v623
        %v715 = vpack.c.b16 %v631, %v624
        %v716 = vpack.c.b16 %v639, %v632
        %v717 = vpack.c.b16 %v640, %v633
        %v718 = vpack.c.b16 %v641, %v634
        %v719 = vpack.c.b16 %v642, %v635
        %v720 = vpack.c.b16 %v643, %v636
        %v721 = vpack.c.b16 %v644, %v637
        %v722 = vpack.c.b16 %v645, %v638
        %v723 = vpack.c.b16 %v653, %v646
        %v724 = vpack.c.b16 %v654, %v647
        %v725 = vpack.c.b16 %v655, %v648
        %v726 = vpack.c.b16 %v656, %v649
        %v727 = vpack.c.b16 %v657, %v650
        %v728 = vpack.c.b16 %v658, %v651
        %v729 = vpack.c.b16 %v659, %v652
        %v730 = vpack.c.b16 %v667, %v660
        %v731 = vpack.c.b16 %v668, %v661
        %v732 = vpack.c.b16 %v669, %v662
        %v733 = vpack.c.b16 %v670, %v663
        %v734 = vpack.c.b16 %v671, %v664
        %v735 = vpack.c.b16 %v672, %v665
        %v736 = vpack.c.b16 %v673, %v666
        %v737 = vpack.c.b16 %v681, %v674
        %v738 = vpack.c.b16 %v682, %v675
        %v739 = vpack.c.b16 %v683, %v676
        %v740 = vpack.c.b16 %v684, %v677
        %v741 = vpack.c.b16 %v685, %v678
        %v742 = vpack.c.b16 %v686, %v679
        %v743 = vpack.c.b16 %v687, %v680
        %v912 = vunpack.c.l.b16 %v393
        %v913 = vunpack.c.l.b16 %v394
        %v914 = vunpack.c.l.b16 %v395
        %v915 = vunpack.c.l.b16 %v396
        %v916 = vunpack.c.l.b16 %v397
        %v917 = vunpack.c.l.b16 %v398
        %v918 = vunpack.c.l.b16 %v399
        %v919 = vunpack.c.l.b16 %v400
        %v920 = vunpack.c.l.b16 %v401
        %v921 = vunpack.c.l.b16 %v402
        %v922 = vunpack.c.l.b16 %v403
        %v923 = vunpack.c.l.b16 %v404
        %v924 = vunpack.c.l.b16 %v405
        %v925 = vunpack.c.l.b16 %v406
        %v926 = vunpack.c.l.b16 %v407
        %v927 = vunpack.c.l.b16 %v408
        %v928 = vunpack.c.l.b16 %v409
        %v929 = vunpack.c.l.b16 %v410
        %v930 = vunpack.c.l.b16 %v411
        %v931 = vunpack.c.l.b16 %v412
        %v932 = vunpack.c.l.b16 %v413
        %v933 = vunpack.c.l.b16 %v414
        %v934 = vunpack.c.l.b16 %v415
        %v935 = vunpack.c.l.b16 %v416
        %v936 = vunpack.c.l.b16 %v417
        %v937 = vunpack.c.l.b16 %v418
        %v938 = vunpack.c.l.b16 %v419
        %v939 = vunpack.c.l.b16 %v420
        %v940 = vunpack.c.l.b16 %v421
        %v941 = vunpack.c.l.b16 %v422
        %v942 = vunpack.c.l.b16 %v423
        %v943 = vunpack.c.l.b16 %v424
        %v944 = vunpack.c.l.b16 %v425
        %v945 = vunpack.c.l.b16 %v426
        %v946 = vunpack.c.l.b16 %v427
        %v947 = vunpack.c.l.b16 %v428
        %v948 = vunpack.c.l.b16 %v429
        %v949 = vunpack.c.l.b16 %v430
        %v950 = vunpack.c.l.b16 %v431
        %v951 = vunpack.c.l.b16 %v432
        %v952 = vunpack.c.l.b16 %v433
        %v953 = vunpack.c.l.b16 %v434
        %v954 = vunpack.c.l.b16 %v435
        %v955 = vunpack.c.l.b16 %v436
        %v956 = vunpack.c.l.b16 %v437
        %v957 = vunpack.c.l.b16 %v438
        %v958 = vunpack.c.l.b16 %v439
        %v959 = vunpack.c.l.b16 %v440
        %v960 = vunpack.c.l.b16 %v441
        %v961 = vunpack.c.l.b16 %v442
        %v962 = vunpack.c.l.b16 %v443
        %v963 = vunpack.c.l.b16 %v444
        %v964 = vunpack.c.l.b16 %v445
        %v965 = vunpack.c.l.b16 %v446
        %v966 = vunpack.c.l.b16 %v447
        %v967 = vunpack.c.l.b16 %v448
        %v968 = vunpack.c.l.b16 %v449
        %v969 = vunpack.c.l.b16 %v450
        %v970 = vunpack.c.l.b16 %v451
        %v971 = vunpack.c.l.b16 %v452
        %v972 = vunpack.c.l.b16 %v453
        %v973 = vunpack.c.l.b16 %v454
        %v974 = vunpack.c.l.b16 %v455
        %v975 = vunpack.c.l.b16 %v456
        %v976 = vunpack.c.l.b16 %v457
        %v977 = vunpack.c.l.b16 %v458
        %v978 = vunpack.c.l.b16 %v459
        %v979 = vunpack.c.l.b16 %v460
        %v980 = vunpack.c.l.b16 %v461
        %v981 = vunpack.c.l.b16 %v462
        %v982 = vunpack.c.l.b16 %v463
        %v983 = vunpack.c.l.b16 %v464
        %v984 = vunpack.c.l.b16 %v465
        %v985 = vunpack.c.l.b16 %v466
        %v986 = vunpack.c.l.b16 %v467
        %v987 = vunpack.c.l.b16 %v468
        %v988 = vunpack.c.l.b16 %v469
        %v989 = vunpack.c.l.b16 %v470
        %v990 = vunpack.c.l.b16 %v471
        %v991 = vunpack.c.l.b16 %v472
        %v992 = vunpack.c.l.b16 %v473
        %v993 = vunpack.c.l.b16 %v474
        %v994 = vunpack.c.l.b16 %v475
        %v995 = vunpack.c.l.b16 %v476
        %v996 = vunpack.c.l.b16 %v477
        %v997 = vunpack.c.l.b16 %v478
        %v998 = vunpack.c.l.b16 %v479
        %v999 = vunpack.c.l.b16 %v480
        %v1000 = vunpack.c.l.b16 %v481
        %v1001 = vunpack.c.l.b16 %v482
        %v1002 = vunpack.c.l.b16 %v483
        %v1003 = vunpack.c.l.b16 %v484
        %v1004 = vunpack.c.l.b16 %v485
        %v1005 = vunpack.c.l.b16 %v486
        %v1006 = vunpack.c.l.b16 %v487
        %v1007 = vunpack.c.l.b16 %v488
        %v1008 = vunpack.c.l.b16 %v489
        %v1009 = vunpack.c.l.b16 %v490
        %v1010 = vunpack.c.l.b16 %v491
        %v1011 = vunpack.c.l.b16 %v492
        %v1012 = vunpack.c.l.b16 %v493
        %v1013 = vunpack.c.l.b16 %v494
        %v1014 = vunpack.c.l.b16 %v495
        %v1015 = vunpack.c.l.b16 %v496
        %v1016 = vunpack.c.l.b16 %v497
        %v1017 = vunpack.c.l.b16 %v498
        %v1018 = vunpack.c.l.b16 %v499
        %v1019 = vunpack.c.l.b16 %v500
        %v1020 = vunpack.c.l.b16 %v501
        %v1021 = vunpack.c.l.b16 %v502
        %v1022 = vunpack.c.l.b16 %v503
        %v1023 = vunpack.c.l.b16 %v504
        %v1024 = vpack.c.b16 %v913, %v912
        %v1025 = vpack.c.b16 %v915, %v914
        %v1026 = vpack.c.b16 %v917, %v916
        %v1027 = vpack.c.b16 %v919, %v918
        %v1028 = vpack.c.b16 %v921, %v920
        %v1029 = vpack.c.b16 %v923, %v922
        %v1030 = vpack.c.b16 %v925, %v924
        %v1031 = vpack.c.b16 %v927, %v926
        %v1032 = vpack.c.b16 %v929, %v928
        %v1033 = vpack.c.b16 %v931, %v930
        %v1034 = vpack.c.b16 %v933, %v932
        %v1035 = vpack.c.b16 %v935, %v934
        %v1036 = vpack.c.b16 %v937, %v936
        %v1037 = vpack.c.b16 %v939, %v938
        %v1038 = vpack.c.b16 %v941, %v940
        %v1039 = vpack.c.b16 %v943, %v942
        %v1040 = vpack.c.b16 %v945, %v944
        %v1041 = vpack.c.b16 %v947, %v946
        %v1042 = vpack.c.b16 %v949, %v948
        %v1043 = vpack.c.b16 %v951, %v950
        %v1044 = vpack.c.b16 %v953, %v952
        %v1045 = vpack.c.b16 %v955, %v954
        %v1046 = vpack.c.b16 %v957, %v956
        %v1047 = vpack.c.b16 %v959, %v958
        %v1048 = vpack.c.b16 %v961, %v960
        %v1049 = vpack.c.b16 %v963, %v962
        %v1050 = vpack.c.b16 %v965, %v964
        %v1051 = vpack.c.b16 %v967, %v966
        %v1052 = vpack.c.b16 %v969, %v968
        %v1053 = vpack.c.b16 %v971, %v970
        %v1054 = vpack.c.b16 %v973, %v972
        %v1055 = vpack.c.b16 %v975, %v974
        %v1056 = vpack.c.b16 %v977, %v976
        %v1057 = vpack.c.b16 %v979, %v978
        %v1058 = vpack.c.b16 %v981, %v980
        %v1059 = vpack.c.b16 %v983, %v982
        %v1060 = vpack.c.b16 %v985, %v984
        %v1061 = vpack.c.b16 %v987, %v986
        %v1062 = vpack.c.b16 %v989, %v988
        %v1063 = vpack.c.b16 %v991, %v990
        %v1064 = vpack.c.b16 %v993, %v992
        %v1065 = vpack.c.b16 %v995, %v994
        %v1066 = vpack.c.b16 %v997, %v996
        %v1067 = vpack.c.b16 %v999, %v998
        %v1068 = vpack.c.b16 %v1001, %v1000
        %v1069 = vpack.c.b16 %v1003, %v1002
        %v1070 = vpack.c.b16 %v1005, %v1004
        %v1071 = vpack.c.b16 %v1007, %v1006
        %v1072 = vpack.c.b16 %v1009, %v1008
        %v1073 = vpack.c.b16 %v1011, %v1010
        %v1074 = vpack.c.b16 %v1013, %v1012
        %v1075 = vpack.c.b16 %v1015, %v1014
        %v1076 = vpack.c.b16 %v1017, %v1016
        %v1077 = vpack.c.b16 %v1019, %v1018
        %v1078 = vpack.c.b16 %v1021, %v1020
        %v1079 = vpack.c.b16 %v1023, %v1022
        %1136 = vmatprep.subr.bf16.mxu0 0
        %1137 = vmatpush1.bf16.msra.mxu0 %v1024
        %1138 = vmatprep.subr.bf16.mxu0 0
        %1139 = vmatpush1.bf16.msra.mxu0 %v1025
        %1140 = vmatprep.subr.bf16.mxu0 0
        %1141 = vmatpush1.bf16.msra.mxu0 %v1026
        %1142 = vmatprep.subr.bf16.mxu0 0
        %1143 = vmatpush1.bf16.msra.mxu0 %v1027
        %1144 = vmatprep.subr.bf16.mxu0 0
        %1145 = vmatpush1.bf16.msra.mxu0 %v1028
        %1146 = vmatprep.subr.bf16.mxu0 0
        %1147 = vmatpush1.bf16.msra.mxu0 %v1029
        %1148 = vmatprep.subr.bf16.mxu0 0
        %1149 = vmatpush1.bf16.msra.mxu0 %v1030
        %1150 = vmatprep.subr.bf16.mxu0 0
        %1151 = vmatpush1.bf16.msra.mxu0 %v1031
        %1152 = vmatprep.subr.bf16.mxu0 0
        %1153 = vmatpush1.bf16.msra.mxu0 %v1032
        %1154 = vmatprep.subr.bf16.mxu0 0
        %1155 = vmatpush1.bf16.msra.mxu0 %v1033
        %1156 = vmatprep.subr.bf16.mxu0 0
        %1157 = vmatpush1.bf16.msra.mxu0 %v1034
        %1158 = vmatprep.subr.bf16.mxu0 0
        %1159 = vmatpush1.bf16.msra.mxu0 %v1035
        %1160 = vmatprep.subr.bf16.mxu0 0
        %1161 = vmatpush1.bf16.msra.mxu0 %v1036
        %1162 = vmatprep.subr.bf16.mxu0 0
        %1163 = vmatpush1.bf16.msra.mxu0 %v1037
        %1164 = vmatprep.subr.bf16.mxu0 0
        %1165 = vmatpush1.bf16.msra.mxu0 %v1038
        %1166 = vmatprep.subr.bf16.mxu0 0
        %1167 = vmatpush1.bf16.msra.mxu0 %v1039
        %1168 = vmatprep.mubr.bf16.mxu0 %v689
        %1169 = vmatmul.mubr.bf16.gmra.mrb[0].mxu0 %v688
        %v1170 = vpop.f32.mrb[0].mxu0
        %v1171 = vadd.f32 %v510, %v1170
        %v1172 = vpop.f32.mrb[0].mxu0
        %v1173 = vpop.f32.mrb[0].mxu0
        %v1174 = vadd.f32 %v510, %v1173
        %v1175 = vpop.f32.mrb[0].mxu0
        %1176 = vmatprep.mubr.bf16.mxu0 %v696
        %1177 = vmatmul.mubr.bf16.gmra.mrb[0].mxu0 %v695
        %v1178 = vpop.f32.mrb[0].mxu0
        %v1179 = vadd.f32 %v510, %v1178
        %v1180 = vpop.f32.mrb[0].mxu0
        %v1181 = vpop.f32.mrb[0].mxu0
        %v1182 = vadd.f32 %v510, %v1181
        %v1183 = vpop.f32.mrb[0].mxu0
        %1184 = vmatprep.mubr.bf16.mxu0 %v703
        %1185 = vmatmul.mubr.bf16.gmra.mrb[0].mxu0 %v702
        %v1186 = vpop.f32.mrb[0].mxu0
        %v1187 = vadd.f32 %v510, %v1186
        %v1188 = vpop.f32.mrb[0].mxu0
        %v1189 = vpop.f32.mrb[0].mxu0
        %v1190 = vadd.f32 %v510, %v1189
        %v1191 = vpop.f32.mrb[0].mxu0
        %1192 = vmatprep.mubr.bf16.mxu0 %v710
        %1193 = vmatmul.mubr.bf16.gmra.mrb[0].mxu0 %v709
        %v1194 = vpop.f32.mrb[0].mxu0
        %v1195 = vadd.f32 %v510, %v1194
        %v1196 = vpop.f32.mrb[0].mxu0
        %v1197 = vpop.f32.mrb[0].mxu0
        %v1198 = vadd.f32 %v510, %v1197
        %v1199 = vpop.f32.mrb[0].mxu0
        %1200 = vmatprep.mubr.bf16.mxu0 %v717
        %1201 = vmatmul.mubr.bf16.gmra.mrb[0].mxu0 %v716
        %v1202 = vpop.f32.mrb[0].mxu0
        %v1203 = vadd.f32 %v510, %v1202
        %v1204 = vpop.f32.mrb[0].mxu0
        %v1205 = vpop.f32.mrb[0].mxu0
        %v1206 = vadd.f32 %v510, %v1205
        %v1207 = vpop.f32.mrb[0].mxu0
        %1208 = vmatprep.mubr.bf16.mxu0 %v724
        %1209 = vmatmul.mubr.bf16.gmra.mrb[0].mxu0 %v723
        %v1210 = vpop.f32.mrb[0].mxu0
        %v1211 = vadd.f32 %v510, %v1210
        %v1212 = vpop.f32.mrb[0].mxu0
        %v1213 = vpop.f32.mrb[0].mxu0
        %v1214 = vadd.f32 %v510, %v1213
        %v1215 = vpop.f32.mrb[0].mxu0
        %1216 = vmatprep.mubr.bf16.mxu0 %v731
        %1217 = vmatmul.mubr.bf16.gmra.mrb[0].mxu0 %v730
        %v1218 = vpop.f32.mrb[0].mxu0
        %v1219 = vadd.f32 %v510, %v1218
        %v1220 = vpop.f32.mrb[0].mxu0
        %v1221 = vpop.f32.mrb[0].mxu0
        %v1222 = vadd.f32 %v510, %v1221
        %v1223 = vpop.f32.mrb[0].mxu0
        %1224 = vmatprep.mubr.bf16.mxu0 %v738
        %1225 = vmatmul.mubr.bf16.gmra.mrb[0].mxu0 %v737
        %v1226 = vpop.f32.mrb[0].mxu0
        %v1227 = vadd.f32 %v510, %v1226
        %v1228 = vpop.f32.mrb[0].mxu0
        %v1229 = vpop.f32.mrb[0].mxu0
        %v1230 = vadd.f32 %v510, %v1229
        %v1231 = vpop.f32.mrb[0].mxu0
        %1232 = vdwg.mxu0
        %1233 = vmatprep.subr.bf16.mxu0 0
        %1234 = vmatpush1.bf16.msra.mxu0 %v1040
        %1235 = vmatprep.subr.bf16.mxu0 0
        %1236 = vmatpush1.bf16.msra.mxu0 %v1041
        %1237 = vmatprep.subr.bf16.mxu0 0
        %1238 = vmatpush1.bf16.msra.mxu0 %v1042
        %1239 = vmatprep.subr.bf16.mxu0 0
        %1240 = vmatpush1.bf16.msra.mxu0 %v1043
        %1241 = vmatprep.subr.bf16.mxu0 0
        %1242 = vmatpush1.bf16.msra.mxu0 %v1044
        %1243 = vmatprep.subr.bf16.mxu0 0
        %1244 = vmatpush1.bf16.msra.mxu0 %v1045
        %1245 = vmatprep.subr.bf16.mxu0 0
        %1246 = vmatpush1.bf16.msra.mxu0 %v1046
        %1247 = vmatprep.subr.bf16.mxu0 0
        %1248 = vmatpush1.bf16.msra.mxu0 %v1047
        %1249 = vmatprep.subr.bf16.mxu0 0
        %1250 = vmatpush1.bf16.msra.mxu0 %v1048
        %1251 = vmatprep.subr.bf16.mxu0 0
        %1252 = vmatpush1.bf16.msra.mxu0 %v1049
        %1253 = vmatprep.subr.bf16.mxu0 0
        %1254 = vmatpush1.bf16.msra.mxu0 %v1050
        %1255 = vmatprep.subr.bf16.mxu0 0
        %1256 = vmatpush1.bf16.msra.mxu0 %v1051
        %1257 = vmatprep.subr.bf16.mxu0 0
        %1258 = vmatpush1.bf16.msra.mxu0 %v1052
        %1259 = vmatprep.subr.bf16.mxu0 0
        %1260 = vmatpush1.bf16.msra.mxu0 %v1053
        %1261 = vmatprep.subr.bf16.mxu0 0
        %1262 = vmatpush1.bf16.msra.mxu0 %v1054
        %1263 = vmatprep.subr.bf16.mxu0 0
        %1264 = vmatpush1.bf16.msra.mxu0 %v1055
        %1265 = vmatprep.mubr.bf16.mxu0 %v691
        %1266 = vmatmul.mubr.bf16.gmra.mrb[0].mxu0 %v690
        %v1267 = vpop.f32.mrb[0].mxu0
        %v1268 = vadd.f32 %v1171, %v1267
        %v1269 = vpop.f32.mrb[0].mxu0
        %v1270 = vpop.f32.mrb[0].mxu0
        %v1271 = vadd.f32 %v1174, %v1270
        %v1272 = vpop.f32.mrb[0].mxu0
        %1273 = vmatprep.mubr.bf16.mxu0 %v698
        %1274 = vmatmul.mubr.bf16.gmra.mrb[0].mxu0 %v697
        %v1275 = vpop.f32.mrb[0].mxu0
        %v1276 = vadd.f32 %v1179, %v1275
        %v1277 = vpop.f32.mrb[0].mxu0
        %v1278 = vpop.f32.mrb[0].mxu0
        %v1279 = vadd.f32 %v1182, %v1278
        %v1280 = vpop.f32.mrb[0].mxu0
        %1281 = vmatprep.mubr.bf16.mxu0 %v705
        %1282 = vmatmul.mubr.bf16.gmra.mrb[0].mxu0 %v704
        %v1283 = vpop.f32.mrb[0].mxu0
        %v1284 = vadd.f32 %v1187, %v1283
        %v1285 = vpop.f32.mrb[0].mxu0
        %v1286 = vpop.f32.mrb[0].mxu0
        %v1287 = vadd.f32 %v1190, %v1286
        %v1288 = vpop.f32.mrb[0].mxu0
        %1289 = vmatprep.mubr.bf16.mxu0 %v712
        %1290 = vmatmul.mubr.bf16.gmra.mrb[0].mxu0 %v711
        %v1291 = vpop.f32.mrb[0].mxu0
        %v1292 = vadd.f32 %v1195, %v1291
        %v1293 = vpop.f32.mrb[0].mxu0
        %v1294 = vpop.f32.mrb[0].mxu0
        %v1295 = vadd.f32 %v1198, %v1294
        %v1296 = vpop.f32.mrb[0].mxu0
        %1297 = vmatprep.mubr.bf16.mxu0 %v719
        %1298 = vmatmul.mubr.bf16.gmra.mrb[0].mxu0 %v718
        %v1299 = vpop.f32.mrb[0].mxu0
        %v1300 = vadd.f32 %v1203, %v1299
        %v1301 = vpop.f32.mrb[0].mxu0
        %v1302 = vpop.f32.mrb[0].mxu0
        %v1303 = vadd.f32 %v1206, %v1302
        %v1304 = vpop.f32.mrb[0].mxu0
        %1305 = vmatprep.mubr.bf16.mxu0 %v726
        %1306 = vmatmul.mubr.bf16.gmra.mrb[0].mxu0 %v725
        %v1307 = vpop.f32.mrb[0].mxu0
        %v1308 = vadd.f32 %v1211, %v1307
        %v1309 = vpop.f32.mrb[0].mxu0
        %v1310 = vpop.f32.mrb[0].mxu0
        %v1311 = vadd.f32 %v1214, %v1310
        %v1312 = vpop.f32.mrb[0].mxu0
        %1313 = vmatprep.mubr.bf16.mxu0 %v733
        %1314 = vmatmul.mubr.bf16.gmra.mrb[0].mxu0 %v732
        %v1315 = vpop.f32.mrb[0].mxu0
        %v1316 = vadd.f32 %v1219, %v1315
        %v1317 = vpop.f32.mrb[0].mxu0
        %v1318 = vpop.f32.mrb[0].mxu0
        %v1319 = vadd.f32 %v1222, %v1318
        %v1320 = vpop.f32.mrb[0].mxu0
        %1321 = vmatprep.mubr.bf16.mxu0 %v740
        %1322 = vmatmul.mubr.bf16.gmra.mrb[0].mxu0 %v739
        %v1323 = vpop.f32.mrb[0].mxu0
        %v1324 = vadd.f32 %v1227, %v1323
        %v1325 = vpop.f32.mrb[0].mxu0
        %v1326 = vpop.f32.mrb[0].mxu0
        %v1327 = vadd.f32 %v1230, %v1326
        %v1328 = vpop.f32.mrb[0].mxu0
        %1329 = vdwg.mxu0
        %1330 = vmatprep.subr.bf16.mxu0 0
        %1331 = vmatpush1.bf16.msra.mxu0 %v1056
        %1332 = vmatprep.subr.bf16.mxu0 0
        %1333 = vmatpush1.bf16.msra.mxu0 %v1057
        %1334 = vmatprep.subr.bf16.mxu0 0
        %1335 = vmatpush1.bf16.msra.mxu0 %v1058
        %1336 = vmatprep.subr.bf16.mxu0 0
        %1337 = vmatpush1.bf16.msra.mxu0 %v1059
        %1338 = vmatprep.subr.bf16.mxu0 0
        %1339 = vmatpush1.bf16.msra.mxu0 %v1060
        %1340 = vmatprep.subr.bf16.mxu0 0
        %1341 = vmatpush1.bf16.msra.mxu0 %v1061
        %1342 = vmatprep.subr.bf16.mxu0 0
        %1343 = vmatpush1.bf16.msra.mxu0 %v1062
        %1344 = vmatprep.subr.bf16.mxu0 0
        %1345 = vmatpush1.bf16.msra.mxu0 %v1063
        %1346 = vmatprep.subr.bf16.mxu0 0
        %1347 = vmatpush1.bf16.msra.mxu0 %v1064
        %1348 = vmatprep.subr.bf16.mxu0 0
        %1349 = vmatpush1.bf16.msra.mxu0 %v1065
        %1350 = vmatprep.subr.bf16.mxu0 0
        %1351 = vmatpush1.bf16.msra.mxu0 %v1066
        %1352 = vmatprep.subr.bf16.mxu0 0
        %1353 = vmatpush1.bf16.msra.mxu0 %v1067
        %1354 = vmatprep.subr.bf16.mxu0 0
        %1355 = vmatpush1.bf16.msra.mxu0 %v1068
        %1356 = vmatprep.subr.bf16.mxu0 0
        %1357 = vmatpush1.bf16.msra.mxu0 %v1069
        %1358 = vmatprep.subr.bf16.mxu0 0
        %1359 = vmatpush1.bf16.msra.mxu0 %v1070
        %1360 = vmatprep.subr.bf16.mxu0 0
        %1361 = vmatpush1.bf16.msra.mxu0 %v1071
        %1362 = vmatprep.mubr.bf16.mxu0 %v693
        %1363 = vmatmul.mubr.bf16.gmra.mrb[0].mxu0 %v692
        %v1364 = vpop.f32.mrb[0].mxu0
        %v1365 = vadd.f32 %v1268, %v1364
        %v1366 = vpop.f32.mrb[0].mxu0
        %v1367 = vpop.f32.mrb[0].mxu0
        %v1368 = vadd.f32 %v1271, %v1367
        %v1369 = vpop.f32.mrb[0].mxu0
        %1370 = vmatprep.mubr.bf16.mxu0 %v700
        %1371 = vmatmul.mubr.bf16.gmra.mrb[0].mxu0 %v699
        %v1372 = vpop.f32.mrb[0].mxu0
        %v1373 = vadd.f32 %v1276, %v1372
        %v1374 = vpop.f32.mrb[0].mxu0
        %v1375 = vpop.f32.mrb[0].mxu0
        %v1376 = vadd.f32 %v1279, %v1375
        %v1377 = vpop.f32.mrb[0].mxu0
        %1378 = vmatprep.mubr.bf16.mxu0 %v707
        %1379 = vmatmul.mubr.bf16.gmra.mrb[0].mxu0 %v706
        %v1380 = vpop.f32.mrb[0].mxu0
        %v1381 = vadd.f32 %v1284, %v1380
        %v1382 = vpop.f32.mrb[0].mxu0
        %v1383 = vpop.f32.mrb[0].mxu0
        %v1384 = vadd.f32 %v1287, %v1383
        %v1385 = vpop.f32.mrb[0].mxu0
        %1386 = vmatprep.mubr.bf16.mxu0 %v714
        %1387 = vmatmul.mubr.bf16.gmra.mrb[0].mxu0 %v713
        %v1388 = vpop.f32.mrb[0].mxu0
        %v1389 = vadd.f32 %v1292, %v1388
        %v1390 = vpop.f32.mrb[0].mxu0
        %v1391 = vpop.f32.mrb[0].mxu0
        %v1392 = vadd.f32 %v1295, %v1391
        %v1393 = vpop.f32.mrb[0].mxu0
        %1394 = vmatprep.mubr.bf16.mxu0 %v721
        %1395 = vmatmul.mubr.bf16.gmra.mrb[0].mxu0 %v720
        %v1396 = vpop.f32.mrb[0].mxu0
        %v1397 = vadd.f32 %v1300, %v1396
        %v1398 = vpop.f32.mrb[0].mxu0
        %v1399 = vpop.f32.mrb[0].mxu0
        %v1400 = vadd.f32 %v1303, %v1399
        %v1401 = vpop.f32.mrb[0].mxu0
        %1402 = vmatprep.mubr.bf16.mxu0 %v728
        %1403 = vmatmul.mubr.bf16.gmra.mrb[0].mxu0 %v727
        %v1404 = vpop.f32.mrb[0].mxu0
        %v1405 = vadd.f32 %v1308, %v1404
        %v1406 = vpop.f32.mrb[0].mxu0
        %v1407 = vpop.f32.mrb[0].mxu0
        %v1408 = vadd.f32 %v1311, %v1407
        %v1409 = vpop.f32.mrb[0].mxu0
        %1410 = vmatprep.mubr.bf16.mxu0 %v735
        %1411 = vmatmul.mubr.bf16.gmra.mrb[0].mxu0 %v734
        %v1412 = vpop.f32.mrb[0].mxu0
        %v1413 = vadd.f32 %v1316, %v1412
        %v1414 = vpop.f32.mrb[0].mxu0
        %v1415 = vpop.f32.mrb[0].mxu0
        %v1416 = vadd.f32 %v1319, %v1415
        %v1417 = vpop.f32.mrb[0].mxu0
        %1418 = vmatprep.mubr.bf16.mxu0 %v742
        %1419 = vmatmul.mubr.bf16.gmra.mrb[0].mxu0 %v741
        %v1420 = vpop.f32.mrb[0].mxu0
        %v1421 = vadd.f32 %v1324, %v1420
        %v1422 = vpop.f32.mrb[0].mxu0
        %v1423 = vpop.f32.mrb[0].mxu0
        %v1424 = vadd.f32 %v1327, %v1423
        %v1425 = vpop.f32.mrb[0].mxu0
        %1426 = vdwg.mxu0
        %1427 = vmatprep.subr.bf16.mxu0 0
        %1428 = vmatpush1.bf16.msra.mxu0 %v1072
        %1429 = vmatprep.subr.bf16.mxu0 0
        %1430 = vmatpush1.bf16.msra.mxu0 %v1073
        %1431 = vmatprep.subr.bf16.mxu0 0
        %1432 = vmatpush1.bf16.msra.mxu0 %v1074
        %1433 = vmatprep.subr.bf16.mxu0 0
        %1434 = vmatpush1.bf16.msra.mxu0 %v1075
        %1435 = vmatprep.subr.bf16.mxu0 0
        %1436 = vmatpush1.bf16.msra.mxu0 %v1076
        %1437 = vmatprep.subr.bf16.mxu0 0
        %1438 = vmatpush1.bf16.msra.mxu0 %v1077
        %1439 = vmatprep.subr.bf16.mxu0 0
        %1440 = vmatpush1.bf16.msra.mxu0 %v1078
        %1441 = vmatprep.subr.bf16.mxu0 0
        %1442 = vmatpush1.bf16.msra.mxu0 %v1079
        %1443 = vmatprep.subr.bf16.mxu0 0
        %1444 = vmatpush1.bf16.msra.mxu0 0
        %1445 = vmatprep.subr.bf16.mxu0 0
        %1446 = vmatpush1.bf16.msra.mxu0 0
        %1447 = vmatprep.subr.bf16.mxu0 0
        %1448 = vmatpush1.bf16.msra.mxu0 0
        %1449 = vmatprep.subr.bf16.mxu0 0
        %1450 = vmatpush1.bf16.msra.mxu0 0
        %1451 = vmatprep.subr.bf16.mxu0 0
        %1452 = vmatpush1.bf16.msra.mxu0 0
        %1453 = vmatprep.subr.bf16.mxu0 0
        %1454 = vmatpush1.bf16.msra.mxu0 0
        %1455 = vmatprep.subr.bf16.mxu0 0
        %1456 = vmatpush1.bf16.msra.mxu0 0
        %1457 = vmatprep.subr.bf16.mxu0 0
        %1458 = vmatpush1.bf16.msra.mxu0 0
        %1459 = vmatprep.mubr.bf16.mxu0 0
        %1460 = vmatmul.mubr.bf16.gmra.mrb[0].mxu0 %v694
        %v1461 = vpop.f32.mrb[0].mxu0
        %v1462 = vadd.f32 %v1365, %v1461
        %v1463 = vpop.f32.mrb[0].mxu0
        %v1464 = vpop.f32.mrb[0].mxu0
        %v1465 = vadd.f32 %v1368, %v1464
        %v1466 = vpop.f32.mrb[0].mxu0
        %1467 = vmatprep.mubr.bf16.mxu0 0
        %1468 = vmatmul.mubr.bf16.gmra.mrb[0].mxu0 %v701
        %v1469 = vpop.f32.mrb[0].mxu0
        %v1470 = vadd.f32 %v1373, %v1469
        %v1471 = vpop.f32.mrb[0].mxu0
        %v1472 = vpop.f32.mrb[0].mxu0
        %v1473 = vadd.f32 %v1376, %v1472
        %v1474 = vpop.f32.mrb[0].mxu0
        %1475 = vmatprep.mubr.bf16.mxu0 0
        %1476 = vmatmul.mubr.bf16.gmra.mrb[0].mxu0 %v708
        %v1477 = vpop.f32.mrb[0].mxu0
        %v1478 = vadd.f32 %v1381, %v1477
        %v1479 = vpop.f32.mrb[0].mxu0
        %v1480 = vpop.f32.mrb[0].mxu0
        %v1481 = vadd.f32 %v1384, %v1480
        %v1482 = vpop.f32.mrb[0].mxu0
        %1483 = vmatprep.mubr.bf16.mxu0 0
        %1484 = vmatmul.mubr.bf16.gmra.mrb[0].mxu0 %v715
        %v1485 = vpop.f32.mrb[0].mxu0
        %v1486 = vadd.f32 %v1389, %v1485
        %v1487 = vpop.f32.mrb[0].mxu0
        %v1488 = vpop.f32.mrb[0].mxu0
        %v1489 = vadd.f32 %v1392, %v1488
        %v1490 = vpop.f32.mrb[0].mxu0
        %1491 = vmatprep.mubr.bf16.mxu0 0
        %1492 = vmatmul.mubr.bf16.gmra.mrb[0].mxu0 %v722
        %v1493 = vpop.f32.mrb[0].mxu0
        %v1494 = vadd.f32 %v1397, %v1493
        %v1495 = vpop.f32.mrb[0].mxu0
        %v1496 = vpop.f32.mrb[0].mxu0
        %v1497 = vadd.f32 %v1400, %v1496
        %v1498 = vpop.f32.mrb[0].mxu0
        %1499 = vmatprep.mubr.bf16.mxu0 0
        %1500 = vmatmul.mubr.bf16.gmra.mrb[0].mxu0 %v729
        %v1501 = vpop.f32.mrb[0].mxu0
        %v1502 = vadd.f32 %v1405, %v1501
        %v1503 = vpop.f32.mrb[0].mxu0
        %v1504 = vpop.f32.mrb[0].mxu0
        %v1505 = vadd.f32 %v1408, %v1504
        %v1506 = vpop.f32.mrb[0].mxu0
        %1507 = vmatprep.mubr.bf16.mxu0 0
        %1508 = vmatmul.mubr.bf16.gmra.mrb[0].mxu0 %v736
        %v1509 = vpop.f32.mrb[0].mxu0
        %v1510 = vadd.f32 %v1413, %v1509
        %v1511 = vpop.f32.mrb[0].mxu0
        %v1512 = vpop.f32.mrb[0].mxu0
        %v1513 = vadd.f32 %v1416, %v1512
        %v1514 = vpop.f32.mrb[0].mxu0
        %1515 = vmatprep.mubr.bf16.mxu0 0
        %1516 = vmatmul.mubr.bf16.gmra.mrb[0].mxu0 %v743
        %v1517 = vpop.f32.mrb[0].mxu0
        %v1518 = vadd.f32 %v1421, %v1517
        %v1519 = vpop.f32.mrb[0].mxu0
        %v1520 = vpop.f32.mrb[0].mxu0
        %v1521 = vadd.f32 %v1424, %v1520
        %v1522 = vpop.f32.mrb[0].mxu0
        %1523 = vdwg.mxu0
        %v1524 = vmax.f32 %v1462, 0.0
        %v1525 = vmax.f32 %v1465, 0.0
        %v1526 = vmax.f32 %v1470, 0.0
        %v1527 = vmax.f32 %v1473, 0.0
        %v1528 = vmax.f32 %v1478, 0.0
        %v1529 = vmax.f32 %v1481, 0.0
        %v1530 = vmax.f32 %v1486, 0.0
        %v1531 = vmax.f32 %v1489, 0.0
        %v1532 = vmax.f32 %v1494, 0.0
        %v1533 = vmax.f32 %v1497, 0.0
        %v1534 = vmax.f32 %v1502, 0.0
        %v1535 = vmax.f32 %v1505, 0.0
        %v1536 = vmax.f32 %v1510, 0.0
        %v1537 = vmax.f32 %v1513, 0.0
        %v1538 = vmax.f32 %v1518, 0.0
        %v1539 = vmax.f32 %v1521, 0.0
        %v1540 = vpack.c.bf16 %v1525, %v1524
        %v1541 = vpack.c.bf16 %v1527, %v1526
        %v1542 = vpack.c.bf16 %v1529, %v1528
        %v1543 = vpack.c.bf16 %v1531, %v1530
        %v1544 = vpack.c.bf16 %v1533, %v1532
        %v1545 = vpack.c.bf16 %v1535, %v1534
        %v1546 = vpack.c.bf16 %v1537, %v1536
        %v1547 = vpack.c.bf16 %v1539, %v1538
        %v1548 = vld [vmem:[#allocation8] sm:$0xf]
        %v1549 = vld [vmem:[#allocation8 + $0x4] sm:$0xf]
        %v1550 = vld [vmem:[#allocation8 + $0x8] sm:$0xf]
        %v1551 = vld [vmem:[#allocation8 + $0xc] sm:$0xf]
        %v1552 = vld [vmem:[#allocation8 + $0x10] sm:$0xf]
        %v1553 = vld [vmem:[#allocation8 + $0x14] sm:$0xf]
        %v1554 = vld [vmem:[#allocation8 + $0x18] sm:$0xf]
        %v1555 = vld [vmem:[#allocation8 + $0x1c] sm:$0xf]
        %v1556 = vld [vmem:[#allocation8 + $0x20] sm:$0xf]
        %v1557 = vld [vmem:[#allocation8 + $0x24] sm:$0xf]
        %v1558 = vld [vmem:[#allocation8 + $0x28] sm:$0xf]
        %v1559 = vld [vmem:[#allocation8 + $0x2c] sm:$0xf]
        %v1560 = vld [vmem:[#allocation8 + $0x30] sm:$0xf]
        %v1561 = vld [vmem:[#allocation8 + $0x34] sm:$0xf]
        %v1562 = vld [vmem:[#allocation8 + $0x38] sm:$0xf]
        %v1563 = vld [vmem:[#allocation8 + $0x3c] sm:$0xf]
        %v1564 = vld [vmem:[%s4] sm:$0x1]
        %v1566 = vlaneseq
        %v1567 = vshrl.u32 %v1566, 7
        %v1568 = vsub.s32 0, %v1567
        %v1569 = vrot.slane %v1564, %v1568
        %v1587 = vunpack.c.l.b16 %v1548
        %v1588 = vunpack.c.l.b16 %v1549
        %v1589 = vunpack.c.l.b16 %v1550
        %v1590 = vunpack.c.l.b16 %v1551
        %v1591 = vunpack.c.l.b16 %v1552
        %v1592 = vunpack.c.l.b16 %v1553
        %v1593 = vunpack.c.l.b16 %v1554
        %v1594 = vunpack.c.l.b16 %v1555
        %v1595 = vunpack.c.l.b16 %v1556
        %v1596 = vunpack.c.l.b16 %v1557
        %v1597 = vunpack.c.l.b16 %v1558
        %v1598 = vunpack.c.l.b16 %v1559
        %v1599 = vunpack.c.l.b16 %v1560
        %v1600 = vunpack.c.l.b16 %v1561
        %v1601 = vunpack.c.l.b16 %v1562
        %v1602 = vunpack.c.l.b16 %v1563
        %v1603 = vpack.c.b16 %v1588, %v1587
        %v1604 = vpack.c.b16 %v1590, %v1589
        %v1605 = vpack.c.b16 %v1592, %v1591
        %v1606 = vpack.c.b16 %v1594, %v1593
        %v1607 = vpack.c.b16 %v1596, %v1595
        %v1608 = vpack.c.b16 %v1598, %v1597
        %v1609 = vpack.c.b16 %v1600, %v1599
        %v1610 = vpack.c.b16 %v1602, %v1601
        %1619 = vmatprep.subr.bf16.mxu0 0
        %1620 = vmatpush1.bf16.msra.mxu0 %v1603
        %1621 = vmatprep.subr.bf16.mxu0 0
        %1622 = vmatpush1.bf16.msra.mxu0 %v1604
        %1623 = vmatprep.subr.bf16.mxu0 0
        %1624 = vmatpush1.bf16.msra.mxu0 %v1605
        %1625 = vmatprep.subr.bf16.mxu0 0
        %1626 = vmatpush1.bf16.msra.mxu0 %v1606
        %1627 = vmatprep.subr.bf16.mxu0 0
        %1628 = vmatpush1.bf16.msra.mxu0 %v1607
        %1629 = vmatprep.subr.bf16.mxu0 0
        %1630 = vmatpush1.bf16.msra.mxu0 %v1608
        %1631 = vmatprep.subr.bf16.mxu0 0
        %1632 = vmatpush1.bf16.msra.mxu0 %v1609
        %1633 = vmatprep.subr.bf16.mxu0 0
        %1634 = vmatpush1.bf16.msra.mxu0 %v1610
        %1635 = vmatprep.subr.bf16.mxu0 0
        %1636 = vmatpush1.bf16.msra.mxu0 0
        %1637 = vmatprep.subr.bf16.mxu0 0
        %1638 = vmatpush1.bf16.msra.mxu0 0
        %1639 = vmatprep.subr.bf16.mxu0 0
        %1640 = vmatpush1.bf16.msra.mxu0 0
        %1641 = vmatprep.subr.bf16.mxu0 0
        %1642 = vmatpush1.bf16.msra.mxu0 0
        %1643 = vmatprep.subr.bf16.mxu0 0
        %1644 = vmatpush1.bf16.msra.mxu0 0
        %1645 = vmatprep.subr.bf16.mxu0 0
        %1646 = vmatpush1.bf16.msra.mxu0 0
        %1647 = vmatprep.subr.bf16.mxu0 0
        %1648 = vmatpush1.bf16.msra.mxu0 0
        %1649 = vmatprep.subr.bf16.mxu0 0
        %1650 = vmatpush1.bf16.msra.mxu0 0
        %1651 = vmatprep.mubr.bf16.mxu0 0
        %1652 = vmatmul.mubr.bf16.gmra.mrb[0].mxu0 %v1540
        %v1653 = vpop.f32.mrb[0].mxu0
        %v1654 = vadd.f32 %v1569, %v1653
        %v1655 = vpop.f32.mrb[0].mxu0
        %v1656 = vpop.f32.mrb[0].mxu0
        %v1657 = vadd.f32 %v1569, %v1656
        %v1658 = vpop.f32.mrb[0].mxu0
        %1659 = vmatprep.mubr.bf16.mxu0 0
        %1660 = vmatmul.mubr.bf16.gmra.mrb[0].mxu0 %v1541
        %v1661 = vpop.f32.mrb[0].mxu0
        %v1662 = vadd.f32 %v1569, %v1661
        %v1663 = vpop.f32.mrb[0].mxu0
        %v1664 = vpop.f32.mrb[0].mxu0
        %v1665 = vadd.f32 %v1569, %v1664
        %v1666 = vpop.f32.mrb[0].mxu0
        %1667 = vmatprep.mubr.bf16.mxu0 0
        %1668 = vmatmul.mubr.bf16.gmra.mrb[0].mxu0 %v1542
        %v1669 = vpop.f32.mrb[0].mxu0
        %v1670 = vadd.f32 %v1569, %v1669
        %v1671 = vpop.f32.mrb[0].mxu0
        %v1672 = vpop.f32.mrb[0].mxu0
        %v1673 = vadd.f32 %v1569, %v1672
        %v1674 = vpop.f32.mrb[0].mxu0
        %1675 = vmatprep.mubr.bf16.mxu0 0
        %1676 = vmatmul.mubr.bf16.gmra.mrb[0].mxu0 %v1543
        %v1677 = vpop.f32.mrb[0].mxu0
        %v1678 = vadd.f32 %v1569, %v1677
        %v1679 = vpop.f32.mrb[0].mxu0
        %v1680 = vpop.f32.mrb[0].mxu0
        %v1681 = vadd.f32 %v1569, %v1680
        %v1682 = vpop.f32.mrb[0].mxu0
        %1683 = vmatprep.mubr.bf16.mxu0 0
        %1684 = vmatmul.mubr.bf16.gmra.mrb[0].mxu0 %v1544
        %v1685 = vpop.f32.mrb[0].mxu0
        %v1686 = vadd.f32 %v1569, %v1685
        %v1687 = vpop.f32.mrb[0].mxu0
        %v1688 = vpop.f32.mrb[0].mxu0
        %v1689 = vadd.f32 %v1569, %v1688
        %v1690 = vpop.f32.mrb[0].mxu0
        %1691 = vmatprep.mubr.bf16.mxu0 0
        %1692 = vmatmul.mubr.bf16.gmra.mrb[0].mxu0 %v1545
        %v1693 = vpop.f32.mrb[0].mxu0
        %v1694 = vadd.f32 %v1569, %v1693
        %v1695 = vpop.f32.mrb[0].mxu0
        %v1696 = vpop.f32.mrb[0].mxu0
        %v1697 = vadd.f32 %v1569, %v1696
        %v1698 = vpop.f32.mrb[0].mxu0
        %1699 = vmatprep.mubr.bf16.mxu0 0
        %1700 = vmatmul.mubr.bf16.gmra.mrb[0].mxu0 %v1546
        %v1701 = vpop.f32.mrb[0].mxu0
        %v1702 = vadd.f32 %v1569, %v1701
        %v1703 = vpop.f32.mrb[0].mxu0
        %v1704 = vpop.f32.mrb[0].mxu0
        %v1705 = vadd.f32 %v1569, %v1704
        %v1706 = vpop.f32.mrb[0].mxu0
        %1707 = vmatprep.mubr.bf16.mxu0 0
        %1708 = vmatmul.mubr.bf16.gmra.mrb[0].mxu0 %v1547
        %v1709 = vpop.f32.mrb[0].mxu0
        %v1710 = vadd.f32 %v1569, %v1709
        %v1711 = vpop.f32.mrb[0].mxu0
        %v1712 = vpop.f32.mrb[0].mxu0
        %v1713 = vadd.f32 %v1569, %v1712
        %v1714 = vpop.f32.mrb[0].mxu0
        %1715 = vdwg.mxu0
        %v1716 = vmax.f32 %v1654, 0.0
        %v1717 = vmax.f32 %v1657, 0.0
        %v1718 = vmax.f32 %v1662, 0.0
        %v1719 = vmax.f32 %v1665, 0.0
        %v1720 = vmax.f32 %v1670, 0.0
        %v1721 = vmax.f32 %v1673, 0.0
        %v1722 = vmax.f32 %v1678, 0.0
        %v1723 = vmax.f32 %v1681, 0.0
        %v1724 = vmax.f32 %v1686, 0.0
        %v1725 = vmax.f32 %v1689, 0.0
        %v1726 = vmax.f32 %v1694, 0.0
        %v1727 = vmax.f32 %v1697, 0.0
        %v1728 = vmax.f32 %v1702, 0.0
        %v1729 = vmax.f32 %v1705, 0.0
        %v1730 = vmax.f32 %v1710, 0.0
        %v1731 = vmax.f32 %v1713, 0.0
        %v1732 = vld [vmem:[%s5] sm:$0x1]
        %s1733 = sld [smem:[#allocation2]]
        %v1734 = vstv %s1733
        %1735 = vmatprep.subr.mxu0 0.0
        %1736 = vmatpush1.xpose.msra.mxu0 %v1716
        %1737 = vmatprep.subr.mxu0 0.0
        %1738 = vmatpush1.xpose.msra.mxu0 %v1717
        %1739 = vmatprep.subr.mxu0 0.0
        %1740 = vmatpush1.xpose.msra.mxu0 %v1718
        %1741 = vmatprep.subr.mxu0 0.0
        %1742 = vmatpush1.xpose.msra.mxu0 %v1719
        %1743 = vmatprep.subr.mxu0 0.0
        %1744 = vmatpush1.xpose.msra.mxu0 %v1720
        %1745 = vmatprep.subr.mxu0 0.0
        %1746 = vmatpush1.xpose.msra.mxu0 %v1721
        %1747 = vmatprep.subr.mxu0 0.0
        %1748 = vmatpush1.xpose.msra.mxu0 %v1722
        %1749 = vmatprep.subr.mxu0 0.0
        %1750 = vmatpush1.xpose.msra.mxu0 %v1723
        %1751 = vmatprep.subr.mxu0 0.0
        %1752 = vmatpush1.xpose.msra.mxu0 %v1724
        %1753 = vmatprep.subr.mxu0 0.0
        %1754 = vmatpush1.xpose.msra.mxu0 %v1725
        %1755 = vmatprep.subr.mxu0 0.0
        %1756 = vmatpush1.xpose.msra.mxu0 %v1726
        %1757 = vmatprep.subr.mxu0 0.0
        %1758 = vmatpush1.xpose.msra.mxu0 %v1727
        %1759 = vmatprep.subr.mxu0 0.0
        %1760 = vmatpush1.xpose.msra.mxu0 %v1728
        %1761 = vmatprep.subr.mxu0 0.0
        %1762 = vmatpush1.xpose.msra.mxu0 %v1729
        %1763 = vmatprep.subr.mxu0 0.0
        %1764 = vmatpush1.xpose.msra.mxu0 %v1730
        %1765 = vmatprep.subr.mxu0 0.0
        %1766 = vmatpush1.xpose.msra.mxu0 %v1731
        %1767 = vmatprep.subr.mxu0 0.0
        %1768 = vmatpush1.xpose.msra.mxu0 0.0
        %1769 = vmatprep.subr.mxu0 0.0
        %1770 = vmatpush1.xpose.msra.mxu0 0.0
        %1771 = vmatprep.subr.mxu0 0.0
        %1772 = vmatpush1.xpose.msra.mxu0 0.0
        %1773 = vmatprep.subr.mxu0 0.0
        %1774 = vmatpush1.xpose.msra.mxu0 0.0
        %1775 = vmatprep.subr.mxu0 0.0
        %1776 = vmatpush1.xpose.msra.mxu0 0.0
        %1777 = vmatprep.subr.mxu0 0.0
        %1778 = vmatpush1.xpose.msra.mxu0 0.0
        %1779 = vmatprep.subr.mxu0 0.0
        %1780 = vmatpush1.xpose.msra.mxu0 0.0
        %1781 = vmatprep.subr.mxu0 0.0
        %1782 = vmatpush1.xpose.msra.mxu0 0.0
        %1783 = vmatprep.subr.mxu0 0.0
        %1784 = vmatpush1.xpose.msra.mxu0 0.0
        %1785 = vmatprep.subr.mxu0 0.0
        %1786 = vmatpush1.xpose.msra.mxu0 0.0
        %1787 = vmatprep.subr.mxu0 0.0
        %1788 = vmatpush1.xpose.msra.mxu0 0.0
        %1789 = vmatprep.subr.mxu0 0.0
        %1790 = vmatpush1.xpose.msra.mxu0 0.0
        %1791 = vmatprep.subr.mxu0 0.0
        %1792 = vmatpush1.xpose.msra.mxu0 0.0
        %1793 = vmatprep.subr.mxu0 0.0
        %1794 = vmatpush1.xpose.msra.mxu0 0.0
        %1795 = vmatprep.subr.mxu0 0.0
        %1796 = vmatpush1.xpose.msra.mxu0 0.0
        %1797 = vmatprep.subr.mxu0 0.0
        %1798 = vmatpush1.xpose.msra.mxu0 0.0
        %1799 = vmatprep.mubr.f32.mxu0 0.0
        %1800 = vmatmul.mubr.f32.gmra.mrb[0].mxu0 %v1732
        %v1801 = vpop.f32.mrb[0].mxu0
        %v1802 = vadd.f32 %v1734, %v1801
        %v1803 = vpop.f32.mrb[0].mxu0
        %1804 = vdwg.mxu0
        %1805 = vst [vmem:[%s326] sm:$0x1] %v1802
        %s1806 = sand.u32 %s186, 1
        %s1807 = scalar_lea.sflag [#allocation5], %s1806
        %s1808 = sand.u32 %s186, 1
        %s1809 = scalar_lea.vmem [#allocation9], %s1808
        // Predicated region
        $region61: #{tpu_custom_call.1} parent=47 // pred_check
          %p1810 = pneg %p196
        $region62: #{tpu_custom_call.1} parent=47 // pred_check_branch
          %1812 = sbr.rel (%p1810) target = $region64
        $region63: #{tpu_custom_call.1} parent=47 // pred_region
          %s1814 = ssub.s32 16, 16
          %1815 = vsyncadd %s1807, %s1814
          %s1816 = smul.addr %s26, 16
          %s1817 = scalar_lea.hbm %s7, %s1816
          %s1819 = sshll.u32 %s1809, 4
          %s1820 = int_to_ptr.vmem [resolvable:$true] %s1819
          %1822 = dma.vmem_to_hbm [thread:$0]  %s1820, 16, %s1817, %s1807
        $region64: #{tpu_custom_call.1} parent=47 // pred_fallthru
          _
      $region48: #{tpu_custom_call.1} parent=5 // pred_fallthru
        _
      %p1823 = scmp.le.s32.totalorder 2, %s21
      // Predicated region
      $region65: #{tpu_custom_call.1} parent=5 // pred_check
        %p1824 = pneg %p1823
      $region66: #{tpu_custom_call.1} parent=5 // pred_check_branch
        %1826 = sbr.rel (%p1824) target = $region68
      $region67: #{tpu_custom_call.1} parent=5 // pred_region
        %s1827 = ssub.s32 %s21, 2
        // Predicated region
        $region69: #{tpu_custom_call.1} parent=67 // pred_check
          %p1828 = pneg %p202
        $region70: #{tpu_custom_call.1} parent=67 // pred_check_branch
          %1830 = sbr.rel (%p1828) target = $region72
        $region71: #{tpu_custom_call.1} parent=67 // pred_region
          %s1831 = sand.u32 %s187, 1
          %s1832 = scalar_lea.sflag [#allocation5], %s1831
          %s1833 = sand.u32 %s187, 1
          %s1834 = scalar_lea.vmem [#allocation9], %s1833
          %1835 = dma.done %s1832, 16
        $region72: #{tpu_custom_call.1} parent=67 // pred_fallthru
          _
      $region68: #{tpu_custom_call.1} parent=5 // pred_fallthru
        _
    $region6: #{tpu_custom_call.1} parent=1 // loop_footer
      %s25 = sadd.s32 1, %s21
    $region7: #{tpu_custom_call.1} parent=1 // loop_footer_branch
      %20 = sbr.rel target = $region3
    $region8: #{tpu_custom_call.1} parent=1 // loop_exit
      _
    %1836 = vsyncpa [#allocation4], 1
    %s1837 = scalar_lea.sflag [#allocation4], 1
    %1838 = vsyncpa %s1837, 1
    %1839 = vsyncpa [#allocation7], 1
    %1840 = vsyncpa [#allocation5], 1
    %s1841 = scalar_lea.sflag [#allocation5], 1
    %1842 = vsyncpa %s1841, 1

</llo_original>
